<compile_context>
chip_gen: v6e
topology: v6e:2x2x1
jax: 0.10.0
libtpu: 0.0.40
codegen_flags: <defaults>
</compile_context>

<pallas_src>
import numpy as np
import jax
import jax.numpy as jnp
from jax.experimental import pallas as pl
from jax.experimental.pallas import tpu as pltpu


def _adaptive_xattn_kernel(q_ref, qs_ref,
                           w1_ref, b1_ref,
                           w2_ref, b2_ref,
                           patt2d_ref,
                           wo_ref, bo_ref,
                           out_ref):
    """One batch tile of AdaptiveCrossAttention.

    q_ref      : (bm, D)    query features (storage dtype, e.g. bf16)
    qs_ref     : (bm, 2D)   pre-concatenated [query, support]
    w1_ref     : (2D, D)    selector Linear #1 (transposed)
    b1_ref     : (1, D)     f32
    w2_ref     : (D, P)     selector Linear #2 (transposed)
    b2_ref     : (1, P)     f32
    patt2d_ref : (D, P*D)   patterns, patterns[p, i, j] -> patt2d[i, p*D + j]
    wo_ref     : (D, D)     output projection (transposed)
    bo_ref     : (1, D)     f32
    out_ref    : (bm, D)
    """
    D = q_ref.shape[-1]
    P = w2_ref.shape[-1]

    q = q_ref[...]

    # ---- pattern selector: Linear(2D->D) -> ReLU -> Linear(D->P) -> Softmax --
    h = jnp.dot(qs_ref[...], w1_ref[...],
                preferred_element_type=jnp.float32) + b1_ref[...]      # f32 acc
    h = jnp.maximum(h, 0.0)

    logits = jnp.dot(h.astype(w2_ref.dtype), w2_ref[...],
                     preferred_element_type=jnp.float32) + b2_ref[...]
    m = jnp.max(logits, axis=-1, keepdims=True)
    e = jnp.exp(logits - m)
    pattern_weights = e * pl.reciprocal(
        jnp.sum(e, axis=-1, keepdims=True), approx=False)              # (bm, P) f32

    # ---- pattern-weighted bilinear attention ---------------------------------
    # aligned[b, j] = sum_p w[b, p] * (q[b, :] @ patterns[p])[j]
    # One wide MXU push (N = P*D) instead of P small ones; the weighting is
    # P lane-aligned (D multiple of 128) slices combined with VPU FMAs.
    qp_all = jnp.dot(q, patt2d_ref[...],
                     preferred_element_type=jnp.float32)               # (bm, P*D)
    aligned = pattern_weights[:, 0:1] * qp_all[:, 0:D]
    for p in range(1, P):                                              # small static unroll
        aligned = aligned + pattern_weights[:, p:p + 1] * qp_all[:, p * D:(p + 1) * D]

    # ---- output projection ----------------------------------------------------
    out = jnp.dot(aligned.astype(wo_ref.dtype), wo_ref[...],
                  preferred_element_type=jnp.float32) + bo_ref[...]
    out_ref[...] = out.astype(out_ref.dtype)


def _default_block_b(B):
    """Fill the MXU M dimension (>=128) and keep >=2 grid steps when possible
    so the 'parallel' batch axis can shard across the 2 TensorCores of v7x."""
    for cand in (256, 128):
        if B % cand == 0 and B // cand >= 2:
            return cand
    if B % 128 == 0:
        return 128
    return B  # small batch: single full-extent tile


def adaptive_cross_attention(query, support, params, *, block_b=None, out_dtype=None):
    """AdaptiveCrossAttention forward.  query/support: (B, D).  Returns (B, D)."""
    B, D = query.shape
    P = params["w2"].shape[-1]
    assert support.shape == (B, D)
    assert params["w1"].shape == (2 * D, D)
    assert params["patterns2d"].shape == (D, P * D)

    if out_dtype is None:
        out_dtype = query.dtype
    if block_b is None:
        block_b = _default_block_b(B)
    assert B % block_b == 0, "block_b must divide B"
    assert block_b == B or block_b % 8 == 0, \
        "block_b must be a multiple of 8 (sublane) or equal to B"

    # Selector input [q, s] built once in the wrapper (single K=256 MXU push
    # in-kernel; avoids an in-kernel concatenate).
    combined = jnp.concatenate([query, support], axis=-1)              # (B, 2D)

    grid = (B // block_b,)
    const = lambda i: (0, 0)   # weights: same block every step -> no re-DMA

    in_specs = [
        pl.BlockSpec((block_b, D), lambda i: (i, 0)),      # query
        pl.BlockSpec((block_b, 2 * D), lambda i: (i, 0)),  # [query, support]
        pl.BlockSpec((2 * D, D), const),                   # W1 (stacked, transposed)
        pl.BlockSpec((1, D), const),                       # b1
        pl.BlockSpec((D, P), const),                       # W2 (transposed)
        pl.BlockSpec((1, P), const),                       # b2
        pl.BlockSpec((D, P * D), const),                   # patterns as (D, P*D)
        pl.BlockSpec((D, D), const),                       # Wo (transposed)
        pl.BlockSpec((1, D), const),                       # bo
    ]
    out_specs = pl.BlockSpec((block_b, D), lambda i: (i, 0))

    fn = pl.pallas_call(
        _adaptive_xattn_kernel,
        out_shape=jax.ShapeDtypeStruct((B, D), out_dtype),
        grid_spec=pltpu.PrefetchScalarGridSpec(
            num_scalar_prefetch=0,
            grid=grid,
            in_specs=in_specs,
            out_specs=out_specs,
        ),
        compiler_params=pltpu.CompilerParams(
            dimension_semantics=("parallel",),
            vmem_limit_bytes=32 * 1024 * 1024,
        ),
    )
    return fn(query, combined,
              params["w1"], params["b1"],
              params["w2"], params["b2"],
              params["patterns2d"],
              params["wo"], params["bo"])


def cast_params(params, dtype):
    """Cast MXU operands (weights / patterns) to `dtype`; biases stay f32
    (they are added to the f32 accumulator)."""
    out = dict(params)
    for k in ("patterns", "patterns2d", "w1", "w2", "wo"):
        out[k] = params[k].astype(dtype)
    return out


def init_params(key, feature_dim, num_patterns, dtype=jnp.float32):
    """Parameters matching the PyTorch module __init__ (xavier_uniform linears,
    zero biases, randn patterns), pre-transposed / reshaped for the kernel."""
    k_patt, k_w1, k_w2, k_wo = jax.random.split(key, 4)
    D, P = feature_dim, num_patterns

    def xavier_uniform(k, out_dim, in_dim):
        limit = float(np.sqrt(6.0 / (in_dim + out_dim)))
        return jax.random.uniform(k, (out_dim, in_dim), jnp.float32, -limit, limit)

    patterns = jax.random.normal(k_patt, (P, D, D), jnp.float32)   # nn.Parameter(randn)
    # patterns2d[i, p*D + j] = patterns[p, i, j]  -> single (bm, D) @ (D, P*D)
    patterns2d = jnp.transpose(patterns, (1, 0, 2)).reshape(D, P * D)

    w1 = xavier_uniform(k_w1, D, 2 * D).T     # (2D, D): [q, s] @ w1
    w2 = xavier_uniform(k_w2, P, D).T         # (D, P)
    wo = xavier_uniform(k_wo, D, D).T         # (D, D)

    params = {
        "patterns": patterns, "patterns2d": patterns2d,
        "w1": w1, "w2": w2, "wo": wo,
        "b1": jnp.zeros((1, D), jnp.float32),
        "b2": jnp.zeros((1, P), jnp.float32),
        "bo": jnp.zeros((1, D), jnp.float32),
    }
    return cast_params(params, dtype)


def reference_forward(query, support, params):
    """Pure-JAX mirror of the PyTorch forward (f32 math on the stored values)."""
    hi = jax.lax.Precision.HIGHEST
    f32 = jnp.float32
    q = query.astype(f32)
    s = support.astype(f32)
    combined = jnp.concatenate([q, s], axis=-1)
    h = jax.nn.relu(jnp.dot(combined, params["w1"].astype(f32), precision=hi)
                    + params["b1"])
    logits = jnp.dot(h, params["w2"].astype(f32), precision=hi) + params["b2"]
    w = jax.nn.softmax(logits, axis=-1)
    weighted = jnp.einsum("bp,pij->bij", w, params["patterns"].astype(f32),
                          precision=hi)
    aligned = jnp.einsum("bi,bij->bj", q, weighted, precision=hi)
    return jnp.dot(aligned, params["wo"].astype(f32), precision=hi) + params["bo"]


if __name__ == "__main__":
    # Small but MXU-friendly: D multiple of 128, block_b=128, grid=(2,).
    B, D, P = 256, 128, 4
    key = jax.random.PRNGKey(0)
    k_q, k_s, k_p = jax.random.split(key, 3)

    query_f32 = jax.random.normal(k_q, (B, D), jnp.float32)
    support_f32 = jax.random.normal(k_s, (B, D), jnp.float32)
    params_f32 = init_params(k_p, D, P, dtype=jnp.float32)

    # 1) f32 path: tight functional check against the reference.
    out_f32 = jax.block_until_ready(
        adaptive_cross_attention(query_f32, support_f32, params_f32,
                                 out_dtype=jnp.float32))
    ref_f32 = np.asarray(reference_forward(query_f32, support_f32, params_f32))
    np.testing.assert_allclose(np.asarray(out_f32), ref_f32, rtol=2e-4, atol=2e-4)

    # 2) bf16 path (recommended on TPU): bf16 MXU operands, f32 accumulation.
    query_bf = query_f32.astype(jnp.bfloat16)
    support_bf = support_f32.astype(jnp.bfloat16)
    params_bf = cast_params(params_f32, jnp.bfloat16)
    out_bf = jax.block_until_ready(
        adaptive_cross_attention(query_bf, support_bf, params_bf,
                                 out_dtype=jnp.float32))
    ref_bf = np.asarray(reference_forward(query_bf, support_bf, params_bf))
    diff = np.asarray(out_bf) - ref_bf
    rel_rms = float(np.sqrt(np.mean(diff ** 2) / np.mean(ref_bf ** 2)))
    assert rel_rms < 2e-2, f"bf16 path rel RMS error too high: {rel_rms}"

    print("KERNEL_OK")
</pallas_src>

<mosaic_0001>
module attributes {stable_mosaic.version = 11 : i64} {
  func.func @_adaptive_xattn_kernel(%arg0: i32, %arg1: memref<128x128xf32, #tpu.memory_space<vmem>>, %arg2: memref<128x256xf32, #tpu.memory_space<vmem>>, %arg3: memref<256x128xf32, #tpu.memory_space<vmem>>, %arg4: memref<1x128xf32, #tpu.memory_space<vmem>>, %arg5: memref<128x4xf32, #tpu.memory_space<vmem>>, %arg6: memref<1x4xf32, #tpu.memory_space<vmem>>, %arg7: memref<128x512xf32, #tpu.memory_space<vmem>>, %arg8: memref<128x128xf32, #tpu.memory_space<vmem>>, %arg9: memref<1x128xf32, #tpu.memory_space<vmem>>, %arg10: memref<128x128xf32, #tpu.memory_space<vmem>>) attributes {dimension_semantics = [#tpu.dimension_semantics<parallel>], iteration_bounds = array<i64: 2>, scalar_prefetch = 0 : i64, scratch_operands = 0 : i64, tpu.core_type = #tpu.core_type<tc>, window_params = [{transform_indices = @transform_0, window_bounds = array<i64: 128, 128>}, {transform_indices = @transform_1, window_bounds = array<i64: 128, 256>}, {pipeline_mode = #tpu.pipeline_mode<synchronous>, transform_indices = @transform_2, window_bounds = array<i64: 256, 128>}, {pipeline_mode = #tpu.pipeline_mode<synchronous>, transform_indices = @transform_3, window_bounds = array<i64: 1, 128>}, {pipeline_mode = #tpu.pipeline_mode<synchronous>, transform_indices = @transform_4, window_bounds = array<i64: 128, 4>}, {pipeline_mode = #tpu.pipeline_mode<synchronous>, transform_indices = @transform_5, window_bounds = array<i64: 1, 4>}, {pipeline_mode = #tpu.pipeline_mode<synchronous>, transform_indices = @transform_6, window_bounds = array<i64: 128, 512>}, {pipeline_mode = #tpu.pipeline_mode<synchronous>, transform_indices = @transform_7, window_bounds = array<i64: 128, 128>}, {pipeline_mode = #tpu.pipeline_mode<synchronous>, transform_indices = @transform_8, window_bounds = array<i64: 1, 128>}, {transform_indices = @transform_9, window_bounds = array<i64: 128, 128>}]} {
    %c0 = arith.constant 0 : index
    %c0_0 = arith.constant 0 : index
    %0 = vector.load %arg1[%c0, %c0_0] : memref<128x128xf32, #tpu.memory_space<vmem>>, vector<128x128xf32>
    %c0_1 = arith.constant 0 : index
    %c0_2 = arith.constant 0 : index
    %1 = vector.load %arg2[%c0_1, %c0_2] : memref<128x256xf32, #tpu.memory_space<vmem>>, vector<128x256xf32>
    %c0_3 = arith.constant 0 : index
    %c0_4 = arith.constant 0 : index
    %2 = vector.load %arg3[%c0_3, %c0_4] : memref<256x128xf32, #tpu.memory_space<vmem>>, vector<256x128xf32>
    %cst = arith.constant dense<0.000000e+00> : vector<128x128xf32>
    %3 = tpu.matmul %1, %2, %cst {dimension_numbers = #tpu.dot_dimension_numbers<[1], [0], [0], [1], [0, 0, 1, 1], [], []>} : vector<128x256xf32>, vector<256x128xf32>, vector<128x128xf32> -> vector<128x128xf32>
    %c0_5 = arith.constant 0 : index
    %c0_6 = arith.constant 0 : index
    %4 = vector.load %arg4[%c0_5, %c0_6] : memref<1x128xf32, #tpu.memory_space<vmem>>, vector<1x128xf32>
    %5 = vector.broadcast %4 : vector<1x128xf32> to vector<128x128xf32>
    %6 = arith.addf %3, %5 : vector<128x128xf32>
    %cst_7 = arith.constant 0.000000e+00 : f32
    %7 = vector.broadcast %cst_7 : f32 to vector<128x128xf32>
    %8 = arith.maximumf %6, %7 : vector<128x128xf32>
    %c0_8 = arith.constant 0 : index
    %c0_9 = arith.constant 0 : index
    %9 = vector.load %arg5[%c0_8, %c0_9] : memref<128x4xf32, #tpu.memory_space<vmem>>, vector<128x4xf32>
    %cst_10 = arith.constant dense<0.000000e+00> : vector<128x4xf32>
    %10 = tpu.matmul %8, %9, %cst_10 {dimension_numbers = #tpu.dot_dimension_numbers<[1], [0], [0], [1], [0, 0, 1, 1], [], []>} : vector<128x128xf32>, vector<128x4xf32>, vector<128x4xf32> -> vector<128x4xf32>
    %c0_11 = arith.constant 0 : index
    %c0_12 = arith.constant 0 : index
    %11 = vector.load %arg6[%c0_11, %c0_12] : memref<1x4xf32, #tpu.memory_space<vmem>>, vector<1x4xf32>
    %12 = vector.broadcast %11 : vector<1x4xf32> to vector<128x4xf32>
    %13 = arith.addf %10, %12 : vector<128x4xf32>
    %cst_13 = arith.constant dense<0xFF800000> : vector<128xf32>
    %14 = vector.multi_reduction <maximumf>, %13, %cst_13 [1] : vector<128x4xf32> to vector<128xf32>
    %15 = vector.shape_cast %14 : vector<128xf32> to vector<128x1xf32>
    %16 = vector.broadcast %15 : vector<128x1xf32> to vector<128x4xf32>
    %17 = arith.subf %13, %16 : vector<128x4xf32>
    %18 = math.exp %17 : vector<128x4xf32>
    %cst_14 = arith.constant dense<0.000000e+00> : vector<128xf32>
    %19 = vector.multi_reduction <add>, %18, %cst_14 [1] : vector<128x4xf32> to vector<128xf32>
    %20 = vector.shape_cast %19 : vector<128xf32> to vector<128x1xf32>
    %21 = tpu.reciprocal %20 : vector<128x1xf32> -> vector<128x1xf32>
    %22 = vector.broadcast %21 : vector<128x1xf32> to vector<128x4xf32>
    %23 = arith.mulf %18, %22 : vector<128x4xf32>
    %c0_15 = arith.constant 0 : index
    %c0_16 = arith.constant 0 : index
    %24 = vector.load %arg7[%c0_15, %c0_16] : memref<128x512xf32, #tpu.memory_space<vmem>>, vector<128x512xf32>
    %cst_17 = arith.constant dense<0.000000e+00> : vector<128x512xf32>
    %25 = tpu.matmul %0, %24, %cst_17 {dimension_numbers = #tpu.dot_dimension_numbers<[1], [0], [0], [1], [0, 0, 1, 1], [], []>} : vector<128x128xf32>, vector<128x512xf32>, vector<128x512xf32> -> vector<128x512xf32>
    %26 = vector.extract_strided_slice %23 {offsets = [0, 0], sizes = [128, 1], strides = [1, 1]} : vector<128x4xf32> to vector<128x1xf32>
    %27 = vector.extract_strided_slice %25 {offsets = [0, 0], sizes = [128, 128], strides = [1, 1]} : vector<128x512xf32> to vector<128x128xf32>
    %28 = vector.broadcast %26 : vector<128x1xf32> to vector<128x128xf32>
    %29 = arith.mulf %28, %27 : vector<128x128xf32>
    %30 = vector.extract_strided_slice %23 {offsets = [0, 1], sizes = [128, 1], strides = [1, 1]} : vector<128x4xf32> to vector<128x1xf32>
    %31 = vector.extract_strided_slice %25 {offsets = [0, 128], sizes = [128, 128], strides = [1, 1]} : vector<128x512xf32> to vector<128x128xf32>
    %32 = vector.broadcast %30 : vector<128x1xf32> to vector<128x128xf32>
    %33 = arith.mulf %32, %31 : vector<128x128xf32>
    %34 = arith.addf %29, %33 : vector<128x128xf32>
    %35 = vector.extract_strided_slice %23 {offsets = [0, 2], sizes = [128, 1], strides = [1, 1]} : vector<128x4xf32> to vector<128x1xf32>
    %36 = vector.extract_strided_slice %25 {offsets = [0, 256], sizes = [128, 128], strides = [1, 1]} : vector<128x512xf32> to vector<128x128xf32>
    %37 = vector.broadcast %35 : vector<128x1xf32> to vector<128x128xf32>
    %38 = arith.mulf %37, %36 : vector<128x128xf32>
    %39 = arith.addf %34, %38 : vector<128x128xf32>
    %40 = vector.extract_strided_slice %23 {offsets = [0, 3], sizes = [128, 1], strides = [1, 1]} : vector<128x4xf32> to vector<128x1xf32>
    %41 = vector.extract_strided_slice %25 {offsets = [0, 384], sizes = [128, 128], strides = [1, 1]} : vector<128x512xf32> to vector<128x128xf32>
    %42 = vector.broadcast %40 : vector<128x1xf32> to vector<128x128xf32>
    %43 = arith.mulf %42, %41 : vector<128x128xf32>
    %44 = arith.addf %39, %43 : vector<128x128xf32>
    %c0_18 = arith.constant 0 : index
    %c0_19 = arith.constant 0 : index
    %45 = vector.load %arg8[%c0_18, %c0_19] : memref<128x128xf32, #tpu.memory_space<vmem>>, vector<128x128xf32>
    %cst_20 = arith.constant dense<0.000000e+00> : vector<128x128xf32>
    %46 = tpu.matmul %44, %45, %cst_20 {dimension_numbers = #tpu.dot_dimension_numbers<[1], [0], [0], [1], [0, 0, 1, 1], [], []>} : vector<128x128xf32>, vector<128x128xf32>, vector<128x128xf32> -> vector<128x128xf32>
    %c0_21 = arith.constant 0 : index
    %c0_22 = arith.constant 0 : index
    %47 = vector.load %arg9[%c0_21, %c0_22] : memref<1x128xf32, #tpu.memory_space<vmem>>, vector<1x128xf32>
    %48 = vector.broadcast %47 : vector<1x128xf32> to vector<128x128xf32>
    %49 = arith.addf %46, %48 : vector<128x128xf32>
    %c0_23 = arith.constant 0 : index
    %c0_24 = arith.constant 0 : index
    %50 = vector.load %arg10[%c0_23, %c0_24] : memref<128x128xf32, #tpu.memory_space<vmem>>, vector<128x128xf32>
    tpu.vector_store %arg10[%c0_23, %c0_24], %49 {strides = array<i32>} : memref<128x128xf32, #tpu.memory_space<vmem>>, vector<128x128xf32>,
    return
  }
  func.func @transform_0(%arg0: i32) -> (i32, i32) {
    %c0_i32 = arith.constant 0 : i32
    %c0_i32_0 = arith.constant 0 : i32
    return %arg0, %c0_i32 : i32, i32
  }
  func.func @transform_1(%arg0: i32) -> (i32, i32) {
    %c0_i32 = arith.constant 0 : i32
    %c0_i32_0 = arith.constant 0 : i32
    return %arg0, %c0_i32 : i32, i32
  }
  func.func @transform_2(%arg0: i32) -> (i32, i32) {
    %c0_i32 = arith.constant 0 : i32
    %c0_i32_0 = arith.constant 0 : i32
    %c0_i32_1 = arith.constant 0 : i32
    return %c0_i32, %c0_i32_0 : i32, i32
  }
  func.func @transform_3(%arg0: i32) -> (i32, i32) {
    %c0_i32 = arith.constant 0 : i32
    %c0_i32_0 = arith.constant 0 : i32
    %c0_i32_1 = arith.constant 0 : i32
    return %c0_i32, %c0_i32_0 : i32, i32
  }
  func.func @transform_4(%arg0: i32) -> (i32, i32) {
    %c0_i32 = arith.constant 0 : i32
    %c0_i32_0 = arith.constant 0 : i32
    %c0_i32_1 = arith.constant 0 : i32
    return %c0_i32, %c0_i32_0 : i32, i32
  }
  func.func @transform_5(%arg0: i32) -> (i32, i32) {
    %c0_i32 = arith.constant 0 : i32
    %c0_i32_0 = arith.constant 0 : i32
    %c0_i32_1 = arith.constant 0 : i32
    return %c0_i32, %c0_i32_0 : i32, i32
  }
  func.func @transform_6(%arg0: i32) -> (i32, i32) {
    %c0_i32 = arith.constant 0 : i32
    %c0_i32_0 = arith.constant 0 : i32
    %c0_i32_1 = arith.constant 0 : i32
    return %c0_i32, %c0_i32_0 : i32, i32
  }
  func.func @transform_7(%arg0: i32) -> (i32, i32) {
    %c0_i32 = arith.constant 0 : i32
    %c0_i32_0 = arith.constant 0 : i32
    %c0_i32_1 = arith.constant 0 : i32
    return %c0_i32, %c0_i32_0 : i32, i32
  }
  func.func @transform_8(%arg0: i32) -> (i32, i32) {
    %c0_i32 = arith.constant 0 : i32
    %c0_i32_0 = arith.constant 0 : i32
    %c0_i32_1 = arith.constant 0 : i32
    return %c0_i32, %c0_i32_0 : i32, i32
  }
  func.func @transform_9(%arg0: i32) -> (i32, i32) {
    %c0_i32 = arith.constant 0 : i32
    %c0_i32_0 = arith.constant 0 : i32
    return %arg0, %c0_i32 : i32, i32
  }
}

</mosaic_0001>

<llo_original>
// kernel: tpu_custom_call.1
$region0: #{tpu_custom_call.1}
  #allocation0 [shape = 'u32[]', space=smem, size = 0x4, offset = 0x4, fixed_abs, tag = 'smem constant byte address 0x4 - core index']
  #allocation1 [shape = 'u32[144,128]{1,0:T(1,128)}', space=vmem, size = 0x12000, scoped, tag = 'internal scratch']
  %s0 = inlined_call_operand.hbm [shape: f32[256,128], index: 0, kind: input, shape index: {}]
  %s1 = inlined_call_operand.hbm [shape: f32[256,256], index: 1, kind: input, shape index: {}]
  %s2 = inlined_call_operand.hbm [shape: f32[256,128], index: 2, kind: input, shape index: {}]
  %s3 = inlined_call_operand.vmem [shape: f32[1,128], index: 3, kind: input, shape index: {}]
  %s4 = inlined_call_operand.vmem [shape: f32[128,4], index: 4, kind: input, shape index: {}]
  %s5 = inlined_call_operand.vmem [shape: f32[1,4], index: 5, kind: input, shape index: {}]
  %s6 = inlined_call_operand.hbm [shape: f32[128,512], index: 6, kind: input, shape index: {}]
  %s7 = inlined_call_operand.vmem [shape: f32[128,128], index: 7, kind: input, shape index: {}]
  %s8 = inlined_call_operand.vmem [shape: f32[1,128], index: 8, kind: input, shape index: {}]
  %s9 = inlined_call_operand.hbm [shape: f32[256,128], index: 9, kind: output, shape index: {}]
  %s10 = sld [smem:[#allocation0]]
  $region85: #{tpu_custom_call.1} parent=0
    _
  %s12 = ssub.s32 1, %s10
  %s13 = scalar_select 0, %s12, %s10
  $region1: #{tpu_custom_call.1} parent=0
    #allocation2 [shape = 'u8[131072]{0}', space=vmem, size = 0x20000, scoped, tag = 'input window, operand 0']
    #allocation3 [shape = 's32[2]{0}', space=sflag, size = 0x8, scoped, tag = 'scoped memory for tpu_custom_call.1']
    #allocation4 [shape = 's32[2]{0}', space=sflag, size = 0x8, scoped, tag = 'scoped memory for tpu_custom_call.1']
    #allocation5 [shape = 'u8[262144]{0}', space=vmem, size = 0x40000, scoped, tag = 'input window, operand 1']
    #allocation6 [shape = 's32[2]{0}', space=sflag, size = 0x8, scoped, tag = 'scoped memory for tpu_custom_call.1']
    #allocation7 [shape = 'u8[131072]{0}', space=vmem, size = 0x20000, scoped, tag = 'input window, operand 2, single buffered']
    #allocation8 [shape = 'u8[262144]{0}', space=vmem, size = 0x40000, scoped, tag = 'input window, operand 6, single buffered']
    #allocation9 [shape = 's32[1]{0}', space=sflag, size = 0x4, scoped, tag = 'scoped memory for tpu_custom_call.1']
    #allocation10 [shape = 'u8[131072]{0}', space=vmem, size = 0x20000, scoped, tag = 'output window, operand 0']
    %14 = vsyncpa [#allocation3], 0
    %s15 = scalar_lea.sflag [#allocation3], 1
    %16 = vsyncpa %s15, 0
    %17 = vsyncpa [#allocation6], 0
    %s18 = scalar_lea.sflag [#allocation6], 1
    %19 = vsyncpa %s18, 0
    %20 = vsyncpa [#allocation9], 0
    %21 = vsyncpa [#allocation4], 0
    %s22 = scalar_lea.sflag [#allocation4], 1
    %23 = vsyncpa %s22, 0
    loop: start=0, step=1, limit=4
    $region2: #{tpu_custom_call.1} parent=1 // loop_pre_header
      _
    $region3: #{tpu_custom_call.1} parent=1 // loop_header
      %s25 = sphi 0, %s29
      %p26 = scmp.ge.s32.totalorder %s25, 4
      %s35 = sphi 0, %s37
      %s38 = sphi 0, %s35
      %s39 = sphi 0, %s38
      %s55 = sphi 0, %s39
      %s61 = sphi 0, %s63
      %s64 = sphi 0, %s61
      %s65 = sphi 0, %s64
      %s81 = sphi 0, %s65
      %s85 = sphi 0, %s85
      %s87 = sphi 0, %s85
      %s88 = sphi 0, %s87
      %s102 = sphi 0, %s88
      %s106 = sphi 0, %s106
      %s108 = sphi 0, %s106
      %s109 = sphi 0, %s108
      %s123 = sphi 0, %s109
      %s127 = sphi 0, %s127
      %s129 = sphi 0, %s127
      %s130 = sphi 0, %s129
      %s144 = sphi 0, %s130
      %s148 = sphi 0, %s148
      %s150 = sphi 0, %s148
      %s151 = sphi 0, %s150
      %s165 = sphi 0, %s151
      %s169 = sphi 0, %s169
      %s171 = sphi 0, %s169
      %s172 = sphi 0, %s171
      %s186 = sphi 0, %s172
      %s190 = sphi 0, %s190
      %s192 = sphi 0, %s190
      %s193 = sphi 0, %s192
      %s207 = sphi 0, %s193
      %s211 = sphi 0, %s211
      %s213 = sphi 0, %s211
      %s214 = sphi 0, %s213
      %s228 = sphi 0, %s214
      %s234 = sphi 0, %s236
      %s237 = sphi 0, %s234
      %s238 = sphi 0, %s237
      %s254 = sphi 0, %s238
    $region4: #{tpu_custom_call.1} parent=1 // loop_header_branch
      %28 = sbr.rel (%p26) target = $region8
    $region5: #{tpu_custom_call.1} parent=1 // loop_body
      %s30 = ssub.s32 %s25, 1
      %s31 = ssub.s32 %s25, 2
      %s32 = sadd.s32 %s25, 1
      %s33 = ssub.s32 %s25, %s32
      %p34 = scmp.eq.s32.totalorder %s33, 0
      %s36 = sadd.s32 %s35, 1
      %s37 = scalar_select %p34, %s35, %s36
      %p40 = pneg %p34
      %p41 = scmp.eq.s32.totalorder %s25, 1
      %p42 = por %p40, %p41
      %p43 = scmp.ne.s32.totalorder %s35, %s38
      %p44 = scmp.eq.s32.totalorder %s25, 0
      %p45 = por %p43, %p44
      %p46 = scmp.ne.s32.totalorder %s35, %s38
      %p47 = scmp.eq.s32.totalorder %s30, 1
      %p48 = por %p46, %p47
      %p49 = scmp.ne.s32.totalorder %s38, %s39
      %p50 = scmp.eq.s32.totalorder %s30, 0
      %p51 = por %p49, %p50
      %p52 = scmp.ne.s32.totalorder %s38, %s39
      %p53 = scmp.eq.s32.totalorder %s31, 1
      %p54 = por %p52, %p53
      %p56 = scmp.ne.s32.totalorder %s39, %s55
      %p57 = scmp.eq.s32.totalorder %s31, 0
      %p58 = por %p56, %p57
      %s59 = ssub.s32 %s25, %s32
      %p60 = scmp.eq.s32.totalorder %s59, 0
      %s62 = sadd.s32 %s61, 1
      %s63 = scalar_select %p60, %s61, %s62
      %p66 = pneg %p60
      %p67 = scmp.eq.s32.totalorder %s25, 1
      %p68 = por %p66, %p67
      %p69 = scmp.ne.s32.totalorder %s61, %s64
      %p70 = scmp.eq.s32.totalorder %s25, 0
      %p71 = por %p69, %p70
      %p72 = scmp.ne.s32.totalorder %s61, %s64
      %p73 = scmp.eq.s32.totalorder %s30, 1
      %p74 = por %p72, %p73
      %p75 = scmp.ne.s32.totalorder %s64, %s65
      %p76 = scmp.eq.s32.totalorder %s30, 0
      %p77 = por %p75, %p76
      %p78 = scmp.ne.s32.totalorder %s64, %s65
      %p79 = scmp.eq.s32.totalorder %s31, 1
      %p80 = por %p78, %p79
      %p82 = scmp.ne.s32.totalorder %s65, %s81
      %p83 = scmp.eq.s32.totalorder %s31, 0
      %p84 = por %p82, %p83
      %s86 = sadd.s32 %s85, 1
      %p89 = scmp.eq.s32.totalorder %s25, 1
      %p90 = scmp.ne.s32.totalorder %s85, %s87
      %p91 = scmp.eq.s32.totalorder %s25, 0
      %p92 = por %p90, %p91
      %p93 = scmp.ne.s32.totalorder %s85, %s87
      %p94 = scmp.eq.s32.totalorder %s30, 1
      %p95 = por %p93, %p94
      %p96 = scmp.ne.s32.totalorder %s87, %s88
      %p97 = scmp.eq.s32.totalorder %s30, 0
      %p98 = por %p96, %p97
      %p99 = scmp.ne.s32.totalorder %s87, %s88
      %p100 = scmp.eq.s32.totalorder %s31, 1
      %p101 = por %p99, %p100
      %p103 = scmp.ne.s32.totalorder %s88, %s102
      %p104 = scmp.eq.s32.totalorder %s31, 0
      %p105 = por %p103, %p104
      %s107 = sadd.s32 %s106, 1
      %p110 = scmp.eq.s32.totalorder %s25, 1
      %p111 = scmp.ne.s32.totalorder %s106, %s108
      %p112 = scmp.eq.s32.totalorder %s25, 0
      %p113 = por %p111, %p112
      %p114 = scmp.ne.s32.totalorder %s106, %s108
      %p115 = scmp.eq.s32.totalorder %s30, 1
      %p116 = por %p114, %p115
      %p117 = scmp.ne.s32.totalorder %s108, %s109
      %p118 = scmp.eq.s32.totalorder %s30, 0
      %p119 = por %p117, %p118
      %p120 = scmp.ne.s32.totalorder %s108, %s109
      %p121 = scmp.eq.s32.totalorder %s31, 1
      %p122 = por %p120, %p121
      %p124 = scmp.ne.s32.totalorder %s109, %s123
      %p125 = scmp.eq.s32.totalorder %s31, 0
      %p126 = por %p124, %p125
      %s128 = sadd.s32 %s127, 1
      %p131 = scmp.eq.s32.totalorder %s25, 1
      %p132 = scmp.ne.s32.totalorder %s127, %s129
      %p133 = scmp.eq.s32.totalorder %s25, 0
      %p134 = por %p132, %p133
      %p135 = scmp.ne.s32.totalorder %s127, %s129
      %p136 = scmp.eq.s32.totalorder %s30, 1
      %p137 = por %p135, %p136
      %p138 = scmp.ne.s32.totalorder %s129, %s130
      %p139 = scmp.eq.s32.totalorder %s30, 0
      %p140 = por %p138, %p139
      %p141 = scmp.ne.s32.totalorder %s129, %s130
      %p142 = scmp.eq.s32.totalorder %s31, 1
      %p143 = por %p141, %p142
      %p145 = scmp.ne.s32.totalorder %s130, %s144
      %p146 = scmp.eq.s32.totalorder %s31, 0
      %p147 = por %p145, %p146
      %s149 = sadd.s32 %s148, 1
      %p152 = scmp.eq.s32.totalorder %s25, 1
      %p153 = scmp.ne.s32.totalorder %s148, %s150
      %p154 = scmp.eq.s32.totalorder %s25, 0
      %p155 = por %p153, %p154
      %p156 = scmp.ne.s32.totalorder %s148, %s150
      %p157 = scmp.eq.s32.totalorder %s30, 1
      %p158 = por %p156, %p157
      %p159 = scmp.ne.s32.totalorder %s150, %s151
      %p160 = scmp.eq.s32.totalorder %s30, 0
      %p161 = por %p159, %p160
      %p162 = scmp.ne.s32.totalorder %s150, %s151
      %p163 = scmp.eq.s32.totalorder %s31, 1
      %p164 = por %p162, %p163
      %p166 = scmp.ne.s32.totalorder %s151, %s165
      %p167 = scmp.eq.s32.totalorder %s31, 0
      %p168 = por %p166, %p167
      %s170 = sadd.s32 %s169, 1
      %p173 = scmp.eq.s32.totalorder %s25, 1
      %p174 = scmp.ne.s32.totalorder %s169, %s171
      %p175 = scmp.eq.s32.totalorder %s25, 0
      %p176 = por %p174, %p175
      %p177 = scmp.ne.s32.totalorder %s169, %s171
      %p178 = scmp.eq.s32.totalorder %s30, 1
      %p179 = por %p177, %p178
      %p180 = scmp.ne.s32.totalorder %s171, %s172
      %p181 = scmp.eq.s32.totalorder %s30, 0
      %p182 = por %p180, %p181
      %p183 = scmp.ne.s32.totalorder %s171, %s172
      %p184 = scmp.eq.s32.totalorder %s31, 1
      %p185 = por %p183, %p184
      %p187 = scmp.ne.s32.totalorder %s172, %s186
      %p188 = scmp.eq.s32.totalorder %s31, 0
      %p189 = por %p187, %p188
      %s191 = sadd.s32 %s190, 1
      %p194 = scmp.eq.s32.totalorder %s25, 1
      %p195 = scmp.ne.s32.totalorder %s190, %s192
      %p196 = scmp.eq.s32.totalorder %s25, 0
      %p197 = por %p195, %p196
      %p198 = scmp.ne.s32.totalorder %s190, %s192
      %p199 = scmp.eq.s32.totalorder %s30, 1
      %p200 = por %p198, %p199
      %p201 = scmp.ne.s32.totalorder %s192, %s193
      %p202 = scmp.eq.s32.totalorder %s30, 0
      %p203 = por %p201, %p202
      %p204 = scmp.ne.s32.totalorder %s192, %s193
      %p205 = scmp.eq.s32.totalorder %s31, 1
      %p206 = por %p204, %p205
      %p208 = scmp.ne.s32.totalorder %s193, %s207
      %p209 = scmp.eq.s32.totalorder %s31, 0
      %p210 = por %p208, %p209
      %s212 = sadd.s32 %s211, 1
      %p215 = scmp.eq.s32.totalorder %s25, 1
      %p216 = scmp.ne.s32.totalorder %s211, %s213
      %p217 = scmp.eq.s32.totalorder %s25, 0
      %p218 = por %p216, %p217
      %p219 = scmp.ne.s32.totalorder %s211, %s213
      %p220 = scmp.eq.s32.totalorder %s30, 1
      %p221 = por %p219, %p220
      %p222 = scmp.ne.s32.totalorder %s213, %s214
      %p223 = scmp.eq.s32.totalorder %s30, 0
      %p224 = por %p222, %p223
      %p225 = scmp.ne.s32.totalorder %s213, %s214
      %p226 = scmp.eq.s32.totalorder %s31, 1
      %p227 = por %p225, %p226
      %p229 = scmp.ne.s32.totalorder %s214, %s228
      %p230 = scmp.eq.s32.totalorder %s31, 0
      %p231 = por %p229, %p230
      %s232 = ssub.s32 %s25, %s32
      %p233 = scmp.eq.s32.totalorder %s232, 0
      %s235 = sadd.s32 %s234, 1
      %s236 = scalar_select %p233, %s234, %s235
      %p239 = pneg %p233
      %p240 = scmp.eq.s32.totalorder %s25, 1
      %p241 = por %p239, %p240
      %p242 = scmp.ne.s32.totalorder %s234, %s237
      %p243 = scmp.eq.s32.totalorder %s25, 0
      %p244 = por %p242, %p243
      %p245 = scmp.ne.s32.totalorder %s234, %s237
      %p246 = scmp.eq.s32.totalorder %s30, 1
      %p247 = por %p245, %p246
      %p248 = scmp.ne.s32.totalorder %s237, %s238
      %p249 = scmp.eq.s32.totalorder %s30, 0
      %p250 = por %p248, %p249
      %p251 = scmp.ne.s32.totalorder %s237, %s238
      %p252 = scmp.eq.s32.totalorder %s31, 1
      %p253 = por %p251, %p252
      %p255 = scmp.ne.s32.totalorder %s238, %s254
      %p256 = scmp.eq.s32.totalorder %s31, 0
      %p257 = por %p255, %p256
      %p258 = scmp.le.s32.totalorder 1, %s25
      %p259 = scmp.lt.s32.totalorder %s25, 3
      %p260 = pnand %p258, %p259
      %p261 = pneg %p260
      // Predicated region
      $region9: #{tpu_custom_call.1} parent=5 // pred_check
        _
      $region10: #{tpu_custom_call.1} parent=5 // pred_check_branch
        %263 = sbr.rel (%p260) target = $region12
      $region11: #{tpu_custom_call.1} parent=5 // pred_region
        %s264 = ssub.s32 %s25, 1
        // Predicated region
        $region13: #{tpu_custom_call.1} parent=11 // pred_check
          %p265 = pneg %p98
        $region14: #{tpu_custom_call.1} parent=11 // pred_check_branch
          %267 = sbr.rel (%p265) target = $region16
        $region15: #{tpu_custom_call.1} parent=11 // pred_region
          %s269 = ssub.s32 4096, 4096
          %270 = vsyncadd [#allocation6], %s269
          %s271 = sshll.u32 [#allocation7], 4
          %s272 = int_to_ptr.vmem [resolvable:$true] %s271
          %277 = dma.hbm_to_vmem [thread:$0]  %s2, 4096, %s272, [#allocation6], 128, 128, 8
        $region16: #{tpu_custom_call.1} parent=11 // pred_fallthru
          _
        // Predicated region
        $region17: #{tpu_custom_call.1} parent=11 // pred_check
          %p278 = pneg %p119
        $region18: #{tpu_custom_call.1} parent=11 // pred_check_branch
          %280 = sbr.rel (%p278) target = $region20
        $region19: #{tpu_custom_call.1} parent=11 // pred_region
          _
        $region20: #{tpu_custom_call.1} parent=11 // pred_fallthru
          _
        // Predicated region
        $region21: #{tpu_custom_call.1} parent=11 // pred_check
          %p281 = pneg %p140
        $region22: #{tpu_custom_call.1} parent=11 // pred_check_branch
          %283 = sbr.rel (%p281) target = $region24
        $region23: #{tpu_custom_call.1} parent=11 // pred_region
          _
        $region24: #{tpu_custom_call.1} parent=11 // pred_fallthru
          _
        // Predicated region
        $region25: #{tpu_custom_call.1} parent=11 // pred_check
          %p284 = pneg %p161
        $region26: #{tpu_custom_call.1} parent=11 // pred_check_branch
          %286 = sbr.rel (%p284) target = $region28
        $region27: #{tpu_custom_call.1} parent=11 // pred_region
          _
        $region28: #{tpu_custom_call.1} parent=11 // pred_fallthru
          _
        // Predicated region
        $region29: #{tpu_custom_call.1} parent=11 // pred_check
          %p287 = pneg %p182
        $region30: #{tpu_custom_call.1} parent=11 // pred_check_branch
          %289 = sbr.rel (%p287) target = $region32
        $region31: #{tpu_custom_call.1} parent=11 // pred_region
          %s291 = ssub.s32 8192, 8192
          %292 = vsyncadd [#allocation9], %s291
          %s293 = sshll.u32 [#allocation8], 4
          %s294 = int_to_ptr.vmem [resolvable:$true] %s293
          %299 = dma.hbm_to_vmem [thread:$0]  %s6, 8192, %s294, [#allocation9], 512, 512, 32
        $region32: #{tpu_custom_call.1} parent=11 // pred_fallthru
          _
        // Predicated region
        $region33: #{tpu_custom_call.1} parent=11 // pred_check
          %p300 = pneg %p203
        $region34: #{tpu_custom_call.1} parent=11 // pred_check_branch
          %302 = sbr.rel (%p300) target = $region36
        $region35: #{tpu_custom_call.1} parent=11 // pred_region
          _
        $region36: #{tpu_custom_call.1} parent=11 // pred_fallthru
          _
        // Predicated region
        $region37: #{tpu_custom_call.1} parent=11 // pred_check
          %p303 = pneg %p224
        $region38: #{tpu_custom_call.1} parent=11 // pred_check_branch
          %305 = sbr.rel (%p303) target = $region40
        $region39: #{tpu_custom_call.1} parent=11 // pred_region
          _
        $region40: #{tpu_custom_call.1} parent=11 // pred_fallthru
          _
      $region12: #{tpu_custom_call.1} parent=5 // pred_fallthru
        _
      %p306 = scmp.lt.s32.totalorder %s25, 2
      // Predicated region
      $region41: #{tpu_custom_call.1} parent=5 // pred_check
        %p307 = pneg %p306
      $region42: #{tpu_custom_call.1} parent=5 // pred_check_branch
        %309 = sbr.rel (%p307) target = $region44
      $region43: #{tpu_custom_call.1} parent=5 // pred_region
        // Predicated region
        $region45: #{tpu_custom_call.1} parent=43 // pred_check
          %p310 = pneg %p45
        $region46: #{tpu_custom_call.1} parent=43 // pred_check_branch
          %312 = sbr.rel (%p310) target = $region48
        $region47: #{tpu_custom_call.1} parent=43 // pred_region
          %s313 = sand.u32 %s35, 1
          %s314 = scalar_lea.sflag [#allocation3], %s313
          %s315 = sand.u32 %s35, 1
          %s316 = smul.addr %s315, 128
          %s317 = scalar_lea.vmem [#allocation2], %s316
          %s318 = smul.u32 16, %s25
          %s320 = ssub.s32 2048, 2048
          %321 = vsyncadd %s314, %s320
          %s322 = smul.addr %s318, 128
          %s323 = scalar_lea.hbm %s0, %s322
          %s324 = sshll.u32 %s317, 4
          %s325 = int_to_ptr.vmem [resolvable:$true] %s324
          %330 = dma.hbm_to_vmem [thread:$0]  %s323, 2048, %s325, %s314, 128, 128, 8
        $region48: #{tpu_custom_call.1} parent=43 // pred_fallthru
          _
        // Predicated region
        $region49: #{tpu_custom_call.1} parent=43 // pred_check
          %p331 = pneg %p71
        $region50: #{tpu_custom_call.1} parent=43 // pred_check_branch
          %333 = sbr.rel (%p331) target = $region52
        $region51: #{tpu_custom_call.1} parent=43 // pred_region
          %s334 = sand.u32 %s25, 1
          %s335 = scalar_lea.sflag [#allocation6], %s334
          %s336 = sand.u32 %s61, 1
          %s337 = smul.addr %s336, 256
          %s338 = scalar_lea.vmem [#allocation5], %s337
          %s339 = smul.u32 16, %s25
          %s341 = ssub.s32 4096, 4096
          %342 = vsyncadd %s335, %s341
          %s343 = smul.addr %s339, 2
          %s344 = smul.addr %s343, 128
          %s345 = scalar_lea.hbm %s1, %s344
          %s346 = sshll.u32 %s338, 4
          %s347 = int_to_ptr.vmem [resolvable:$true] %s346
          %352 = dma.hbm_to_vmem [thread:$0]  %s345, 4096, %s347, %s335, 256, 256, 16
        $region52: #{tpu_custom_call.1} parent=43 // pred_fallthru
          _
      $region44: #{tpu_custom_call.1} parent=5 // pred_fallthru
        _
      %p353 = scmp.le.s32.totalorder 1, %s25
      %p354 = scmp.lt.s32.totalorder %s25, 3
      %p355 = pnand %p353, %p354
      %p356 = pneg %p355
      // Predicated region
      $region53: #{tpu_custom_call.1} parent=5 // pred_check
        _
      $region54: #{tpu_custom_call.1} parent=5 // pred_check_branch
        %358 = sbr.rel (%p355) target = $region56
      $region55: #{tpu_custom_call.1} parent=5 // pred_region
        %s359 = ssub.s32 %s25, 1
        %s360 = sand.u32 %s38, 1
        %s361 = scalar_lea.sflag [#allocation3], %s360
        %s362 = sand.u32 %s38, 1
        %s363 = smul.addr %s362, 128
        %s364 = scalar_lea.vmem [#allocation2], %s363
        // Predicated region
        $region57: #{tpu_custom_call.1} parent=55 // pred_check
          %p365 = pneg %p51
        $region58: #{tpu_custom_call.1} parent=55 // pred_check_branch
          %367 = sbr.rel (%p365) target = $region60
        $region59: #{tpu_custom_call.1} parent=55 // pred_region
          %368 = dma.done %s361, 2048
        $region60: #{tpu_custom_call.1} parent=55 // pred_fallthru
          _
        %s369 = sand.u32 %s30, 1
        %s370 = scalar_lea.sflag [#allocation6], %s369
        %s371 = sand.u32 %s64, 1
        %s372 = smul.addr %s371, 256
        %s373 = scalar_lea.vmem [#allocation5], %s372
        // Predicated region
        $region61: #{tpu_custom_call.1} parent=55 // pred_check
          %p374 = pneg %p77
        $region62: #{tpu_custom_call.1} parent=55 // pred_check_branch
          %376 = sbr.rel (%p374) target = $region64
        $region63: #{tpu_custom_call.1} parent=55 // pred_region
          %377 = dma.done %s370, 4096
        $region64: #{tpu_custom_call.1} parent=55 // pred_fallthru
          _
        // Predicated region
        $region65: #{tpu_custom_call.1} parent=55 // pred_check
          %p378 = pneg %p98
        $region66: #{tpu_custom_call.1} parent=55 // pred_check_branch
          %380 = sbr.rel (%p378) target = $region68
        $region67: #{tpu_custom_call.1} parent=55 // pred_region
          %381 = dma.done [#allocation6], 4096
        $region68: #{tpu_custom_call.1} parent=55 // pred_fallthru
          _
        // Predicated region
        $region69: #{tpu_custom_call.1} parent=55 // pred_check
          %p382 = pneg %p182
        $region70: #{tpu_custom_call.1} parent=55 // pred_check_branch
          %384 = sbr.rel (%p382) target = $region72
        $region71: #{tpu_custom_call.1} parent=55 // pred_region
          %385 = dma.done [#allocation9], 8192
        $region72: #{tpu_custom_call.1} parent=55 // pred_fallthru
          _
        %s386 = sand.u32 %s38, 1
        %s387 = scalar_lea.sflag [#allocation3], %s386
        %s388 = sand.u32 %s38, 1
        %s389 = smul.addr %s388, 128
        %s390 = scalar_lea.vmem [#allocation2], %s389
        %p391 = pneg %p51
        %p392 = pneg %p48
        %s393 = sand.u32 %s30, 1
        %s394 = scalar_lea.sflag [#allocation6], %s393
        %s395 = sand.u32 %s64, 1
        %s396 = smul.addr %s395, 256
        %s397 = scalar_lea.vmem [#allocation5], %s396
        %p398 = pneg %p77
        %p399 = pneg %p74
        %p400 = pneg %p98
        %p401 = pneg %p95
        %p402 = pneg %p119
        %p403 = pneg %p116
        %p404 = pneg %p140
        %p405 = pneg %p137
        %p406 = pneg %p161
        %p407 = pneg %p158
        %p408 = pneg %p182
        %p409 = pneg %p179
        %p410 = pneg %p203
        %p411 = pneg %p200
        %p412 = pneg %p224
        %p413 = pneg %p221
        %p414 = pneg %p250
        %p415 = pneg %p247
        %s416 = sand.u32 %s237, 1
        %s417 = scalar_lea.sflag [#allocation4], %s416
        %s418 = sand.u32 %s237, 1
        %s419 = smul.addr %s418, 128
        %s420 = scalar_lea.vmem [#allocation10], %s419
        %s421 = smul.u32 16, %s30
        %s422 = smul.u32 16, %s30
        %s423 = smul.u32 16, %s30
        %v424 = vld [vmem:[%s364] sm:$0xff]
        %v425 = vld [vmem:[%s364 + $0x8] sm:$0xff]
        %v426 = vld [vmem:[%s364 + $0x10] sm:$0xff]
        %v427 = vld [vmem:[%s364 + $0x18] sm:$0xff]
        %v428 = vld [vmem:[%s364 + $0x20] sm:$0xff]
        %v429 = vld [vmem:[%s364 + $0x28] sm:$0xff]
        %v430 = vld [vmem:[%s364 + $0x30] sm:$0xff]
        %v431 = vld [vmem:[%s364 + $0x38] sm:$0xff]
        %v432 = vld [vmem:[%s364 + $0x40] sm:$0xff]
        %v433 = vld [vmem:[%s364 + $0x48] sm:$0xff]
        %v434 = vld [vmem:[%s364 + $0x50] sm:$0xff]
        %v435 = vld [vmem:[%s364 + $0x58] sm:$0xff]
        %v436 = vld [vmem:[%s364 + $0x60] sm:$0xff]
        %v437 = vld [vmem:[%s364 + $0x68] sm:$0xff]
        %v438 = vld [vmem:[%s364 + $0x70] sm:$0xff]
        %v439 = vld [vmem:[%s364 + $0x78] sm:$0xff]
        %v440 = vld [vmem:[%s373] sm:$0xff]
        %v441 = vld [vmem:[%s373 + $0x8] sm:$0xff]
        %v442 = vld [vmem:[%s373 + $0x10] sm:$0xff]
        %v443 = vld [vmem:[%s373 + $0x18] sm:$0xff]
        %v444 = vld [vmem:[%s373 + $0x20] sm:$0xff]
        %v445 = vld [vmem:[%s373 + $0x28] sm:$0xff]
        %v446 = vld [vmem:[%s373 + $0x30] sm:$0xff]
        %v447 = vld [vmem:[%s373 + $0x38] sm:$0xff]
        %v448 = vld [vmem:[%s373 + $0x40] sm:$0xff]
        %v449 = vld [vmem:[%s373 + $0x48] sm:$0xff]
        %v450 = vld [vmem:[%s373 + $0x50] sm:$0xff]
        %v451 = vld [vmem:[%s373 + $0x58] sm:$0xff]
        %v452 = vld [vmem:[%s373 + $0x60] sm:$0xff]
        %v453 = vld [vmem:[%s373 + $0x68] sm:$0xff]
        %v454 = vld [vmem:[%s373 + $0x70] sm:$0xff]
        %v455 = vld [vmem:[%s373 + $0x78] sm:$0xff]
        %v456 = vld [vmem:[%s373 + $0x80] sm:$0xff]
        %v457 = vld [vmem:[%s373 + $0x88] sm:$0xff]
        %v458 = vld [vmem:[%s373 + $0x90] sm:$0xff]
        %v459 = vld [vmem:[%s373 + $0x98] sm:$0xff]
        %v460 = vld [vmem:[%s373 + $0xa0] sm:$0xff]
        %v461 = vld [vmem:[%s373 + $0xa8] sm:$0xff]
        %v462 = vld [vmem:[%s373 + $0xb0] sm:$0xff]
        %v463 = vld [vmem:[%s373 + $0xb8] sm:$0xff]
        %v464 = vld [vmem:[%s373 + $0xc0] sm:$0xff]
        %v465 = vld [vmem:[%s373 + $0xc8] sm:$0xff]
        %v466 = vld [vmem:[%s373 + $0xd0] sm:$0xff]
        %v467 = vld [vmem:[%s373 + $0xd8] sm:$0xff]
        %v468 = vld [vmem:[%s373 + $0xe0] sm:$0xff]
        %v469 = vld [vmem:[%s373 + $0xe8] sm:$0xff]
        %v470 = vld [vmem:[%s373 + $0xf0] sm:$0xff]
        %v471 = vld [vmem:[%s373 + $0xf8] sm:$0xff]
        %v472 = vld [vmem:[#allocation7] sm:$0xff]
        %v473 = vld [vmem:[#allocation7 + $0x8] sm:$0xff]
        %v474 = vld [vmem:[#allocation7 + $0x10] sm:$0xff]
        %v475 = vld [vmem:[#allocation7 + $0x18] sm:$0xff]
        %v476 = vld [vmem:[#allocation7 + $0x20] sm:$0xff]
        %v477 = vld [vmem:[#allocation7 + $0x28] sm:$0xff]
        %v478 = vld [vmem:[#allocation7 + $0x30] sm:$0xff]
        %v479 = vld [vmem:[#allocation7 + $0x38] sm:$0xff]
        %v480 = vld [vmem:[#allocation7 + $0x40] sm:$0xff]
        %v481 = vld [vmem:[#allocation7 + $0x48] sm:$0xff]
        %v482 = vld [vmem:[#allocation7 + $0x50] sm:$0xff]
        %v483 = vld [vmem:[#allocation7 + $0x58] sm:$0xff]
        %v484 = vld [vmem:[#allocation7 + $0x60] sm:$0xff]
        %v485 = vld [vmem:[#allocation7 + $0x68] sm:$0xff]
        %v486 = vld [vmem:[#allocation7 + $0x70] sm:$0xff]
        %v487 = vld [vmem:[#allocation7 + $0x78] sm:$0xff]
        %v488 = vld [vmem:[#allocation7 + $0x80] sm:$0xff]
        %v489 = vld [vmem:[#allocation7 + $0x88] sm:$0xff]
        %v490 = vld [vmem:[#allocation7 + $0x90] sm:$0xff]
        %v491 = vld [vmem:[#allocation7 + $0x98] sm:$0xff]
        %v492 = vld [vmem:[#allocation7 + $0xa0] sm:$0xff]
        %v493 = vld [vmem:[#allocation7 + $0xa8] sm:$0xff]
        %v494 = vld [vmem:[#allocation7 + $0xb0] sm:$0xff]
        %v495 = vld [vmem:[#allocation7 + $0xb8] sm:$0xff]
        %v496 = vld [vmem:[#allocation7 + $0xc0] sm:$0xff]
        %v497 = vld [vmem:[#allocation7 + $0xc8] sm:$0xff]
        %v498 = vld [vmem:[#allocation7 + $0xd0] sm:$0xff]
        %v499 = vld [vmem:[#allocation7 + $0xd8] sm:$0xff]
        %v500 = vld [vmem:[#allocation7 + $0xe0] sm:$0xff]
        %v501 = vld [vmem:[#allocation7 + $0xe8] sm:$0xff]
        %v502 = vld [vmem:[#allocation7 + $0xf0] sm:$0xff]
        %v503 = vld [vmem:[#allocation7 + $0xf8] sm:$0xff]
        %v504 = vld [vmem:[%s3] sm:$0x1]
        %v506 = vlaneseq
        %v507 = vshrl.u32 %v506, 7
        %v508 = vsub.s32 0, %v507
        %v509 = vrot.slane %v504, %v508
        %511 = vmatprep.subr.mxu0 0.0
        %512 = vmatpush1.msra.mxu0 %v487
        %513 = vmatprep.subr.mxu0 0.0
        %514 = vmatpush1.msra.mxu0 %v486
        %515 = vmatprep.subr.mxu0 0.0
        %516 = vmatpush1.msra.mxu0 %v485
        %517 = vmatprep.subr.mxu0 0.0
        %518 = vmatpush1.msra.mxu0 %v484
        %519 = vmatprep.subr.mxu0 0.0
        %520 = vmatpush1.msra.mxu0 %v483
        %521 = vmatprep.subr.mxu0 0.0
        %522 = vmatpush1.msra.mxu0 %v482
        %523 = vmatprep.subr.mxu0 0.0
        %524 = vmatpush1.msra.mxu0 %v481
        %525 = vmatprep.subr.mxu0 0.0
        %526 = vmatpush1.msra.mxu0 %v480
        %527 = vmatprep.subr.mxu0 0.0
        %528 = vmatpush1.msra.mxu0 %v479
        %529 = vmatprep.subr.mxu0 0.0
        %530 = vmatpush1.msra.mxu0 %v478
        %531 = vmatprep.subr.mxu0 0.0
        %532 = vmatpush1.msra.mxu0 %v477
        %533 = vmatprep.subr.mxu0 0.0
        %534 = vmatpush1.msra.mxu0 %v476
        %535 = vmatprep.subr.mxu0 0.0
        %536 = vmatpush1.msra.mxu0 %v475
        %537 = vmatprep.subr.mxu0 0.0
        %538 = vmatpush1.msra.mxu0 %v474
        %539 = vmatprep.subr.mxu0 0.0
        %540 = vmatpush1.msra.mxu0 %v473
        %541 = vmatprep.subr.mxu0 0.0
        %542 = vmatpush1.msra.mxu0 %v472
        %543 = vmatprep.subr.mxu0 0.0
        %544 = vmatpush2.msra.mxu0 %v503
        %545 = vmatprep.subr.mxu0 0.0
        %546 = vmatpush2.msra.mxu0 %v502
        %547 = vmatprep.subr.mxu0 0.0
        %548 = vmatpush2.msra.mxu0 %v501
        %549 = vmatprep.subr.mxu0 0.0
        %550 = vmatpush2.msra.mxu0 %v500
        %551 = vmatprep.subr.mxu0 0.0
        %552 = vmatpush2.msra.mxu0 %v499
        %553 = vmatprep.subr.mxu0 0.0
        %554 = vmatpush2.msra.mxu0 %v498
        %555 = vmatprep.subr.mxu0 0.0
        %556 = vmatpush2.msra.mxu0 %v497
        %557 = vmatprep.subr.mxu0 0.0
        %558 = vmatpush2.msra.mxu0 %v496
        %559 = vmatprep.subr.mxu0 0.0
        %560 = vmatpush2.msra.mxu0 %v495
        %561 = vmatprep.subr.mxu0 0.0
        %562 = vmatpush2.msra.mxu0 %v494
        %563 = vmatprep.subr.mxu0 0.0
        %564 = vmatpush2.msra.mxu0 %v493
        %565 = vmatprep.subr.mxu0 0.0
        %566 = vmatpush2.msra.mxu0 %v492
        %567 = vmatprep.subr.mxu0 0.0
        %568 = vmatpush2.msra.mxu0 %v491
        %569 = vmatprep.subr.mxu0 0.0
        %570 = vmatpush2.msra.mxu0 %v490
        %571 = vmatprep.subr.mxu0 0.0
        %572 = vmatpush2.msra.mxu0 %v489
        %573 = vmatprep.subr.mxu0 0.0
        %574 = vmatpush2.msra.mxu0 %v488
        %575 = vmatprep.mubr.f32.mxu0 %v441
        %576 = vmatmul.mubr.f32.gmra.mxu0 %v440
        %v577 = vpop.f32.mrf.mxu0
        %v578 = vadd.f32 %v509, %v577
        %v579 = vpop.f32.mrf.mxu0
        %580 = vmatprep.mubr.f32.mxu0 %v443
        %581 = vmatmul.mubr.f32.gmra.mxu0 %v442
        %v582 = vpop.f32.mrf.mxu0
        %v583 = vadd.f32 %v509, %v582
        %v584 = vpop.f32.mrf.mxu0
        %585 = vmatprep.mubr.f32.mxu0 %v445
        %586 = vmatmul.mubr.f32.gmra.mxu0 %v444
        %v587 = vpop.f32.mrf.mxu0
        %v588 = vadd.f32 %v509, %v587
        %v589 = vpop.f32.mrf.mxu0
        %590 = vmatprep.mubr.f32.mxu0 %v447
        %591 = vmatmul.mubr.f32.gmra.mxu0 %v446
        %v592 = vpop.f32.mrf.mxu0
        %v593 = vadd.f32 %v509, %v592
        %v594 = vpop.f32.mrf.mxu0
        %595 = vmatprep.mubr.f32.mxu0 %v449
        %596 = vmatmul.mubr.f32.gmra.mxu0 %v448
        %v597 = vpop.f32.mrf.mxu0
        %v598 = vadd.f32 %v509, %v597
        %v599 = vpop.f32.mrf.mxu0
        %600 = vmatprep.mubr.f32.mxu0 %v451
        %601 = vmatmul.mubr.f32.gmra.mxu0 %v450
        %v602 = vpop.f32.mrf.mxu0
        %v603 = vadd.f32 %v509, %v602
        %v604 = vpop.f32.mrf.mxu0
        %605 = vmatprep.mubr.f32.mxu0 %v453
        %606 = vmatmul.mubr.f32.gmra.mxu0 %v452
        %v607 = vpop.f32.mrf.mxu0
        %v608 = vadd.f32 %v509, %v607
        %v609 = vpop.f32.mrf.mxu0
        %610 = vmatprep.mubr.f32.mxu0 %v455
        %611 = vmatmul.mubr.f32.gmra.mxu0 %v454
        %v612 = vpop.f32.mrf.mxu0
        %v613 = vadd.f32 %v509, %v612
        %v614 = vpop.f32.mrf.mxu0
        %615 = vmatprep.mubr.f32.mxu0 %v457
        %616 = vmatmul.mubr.f32.gmra.mxu0 %v456
        %v617 = vpop.f32.mrf.mxu0
        %v618 = vadd.f32 %v509, %v617
        %v619 = vpop.f32.mrf.mxu0
        %620 = vmatprep.mubr.f32.mxu0 %v459
        %621 = vmatmul.mubr.f32.gmra.mxu0 %v458
        %v622 = vpop.f32.mrf.mxu0
        %v623 = vadd.f32 %v509, %v622
        %v624 = vpop.f32.mrf.mxu0
        %625 = vmatprep.mubr.f32.mxu0 %v461
        %626 = vmatmul.mubr.f32.gmra.mxu0 %v460
        %v627 = vpop.f32.mrf.mxu0
        %v628 = vadd.f32 %v509, %v627
        %v629 = vpop.f32.mrf.mxu0
        %630 = vmatprep.mubr.f32.mxu0 %v463
        %631 = vmatmul.mubr.f32.gmra.mxu0 %v462
        %v632 = vpop.f32.mrf.mxu0
        %v633 = vadd.f32 %v509, %v632
        %v634 = vpop.f32.mrf.mxu0
        %635 = vmatprep.mubr.f32.mxu0 %v465
        %636 = vmatmul.mubr.f32.gmra.mxu0 %v464
        %v637 = vpop.f32.mrf.mxu0
        %v638 = vadd.f32 %v509, %v637
        %v639 = vpop.f32.mrf.mxu0
        %640 = vmatprep.mubr.f32.mxu0 %v467
        %641 = vmatmul.mubr.f32.gmra.mxu0 %v466
        %v642 = vpop.f32.mrf.mxu0
        %v643 = vadd.f32 %v509, %v642
        %v644 = vpop.f32.mrf.mxu0
        %645 = vmatprep.mubr.f32.mxu0 %v469
        %646 = vmatmul.mubr.f32.gmra.mxu0 %v468
        %v647 = vpop.f32.mrf.mxu0
        %v648 = vadd.f32 %v509, %v647
        %v649 = vpop.f32.mrf.mxu0
        %650 = vmatprep.mubr.f32.mxu0 %v471
        %651 = vmatmul.mubr.f32.gmra.mxu0 %v470
        %v652 = vpop.f32.mrf.mxu0
        %v653 = vadd.f32 %v509, %v652
        %v654 = vpop.f32.mrf.mxu0
        %655 = vdwg.mxu0
        %v656 = vmax.f32 %v578, 0.0
        %v657 = vmax.f32 %v583, 0.0
        %v658 = vmax.f32 %v588, 0.0
        %v659 = vmax.f32 %v593, 0.0
        %v660 = vmax.f32 %v598, 0.0
        %v661 = vmax.f32 %v603, 0.0
        %v662 = vmax.f32 %v608, 0.0
        %v663 = vmax.f32 %v613, 0.0
        %v664 = vmax.f32 %v618, 0.0
        %v665 = vmax.f32 %v623, 0.0
        %v666 = vmax.f32 %v628, 0.0
        %v667 = vmax.f32 %v633, 0.0
        %v668 = vmax.f32 %v638, 0.0
        %v669 = vmax.f32 %v643, 0.0
        %v670 = vmax.f32 %v648, 0.0
        %v671 = vmax.f32 %v653, 0.0
        %v672 = vld [vmem:[%s4] sm:$0xff]
        %v673 = vld [vmem:[%s4 + $0x8] sm:$0xff]
        %v674 = vld [vmem:[%s4 + $0x10] sm:$0xff]
        %v675 = vld [vmem:[%s4 + $0x18] sm:$0xff]
        %v676 = vld [vmem:[%s4 + $0x20] sm:$0xff]
        %v677 = vld [vmem:[%s4 + $0x28] sm:$0xff]
        %v678 = vld [vmem:[%s4 + $0x30] sm:$0xff]
        %v679 = vld [vmem:[%s4 + $0x38] sm:$0xff]
        %v680 = vld [vmem:[%s4 + $0x40] sm:$0xff]
        %v681 = vld [vmem:[%s4 + $0x48] sm:$0xff]
        %v682 = vld [vmem:[%s4 + $0x50] sm:$0xff]
        %v683 = vld [vmem:[%s4 + $0x58] sm:$0xff]
        %v684 = vld [vmem:[%s4 + $0x60] sm:$0xff]
        %v685 = vld [vmem:[%s4 + $0x68] sm:$0xff]
        %v686 = vld [vmem:[%s4 + $0x70] sm:$0xff]
        %v687 = vld [vmem:[%s4 + $0x78] sm:$0xff]
        %v688 = vld [vmem:[%s5] sm:$0x1]
        %v690 = vlaneseq
        %v691 = vshrl.u32 %v690, 7
        %v692 = vsub.s32 0, %v691
        %v693 = vrot.slane %v688, %v692
        %695 = vmatprep.subr.mxu0 0.0
        %696 = vmatpush1.msra.mxu0 %v687
        %697 = vmatprep.subr.mxu0 0.0
        %698 = vmatpush1.msra.mxu0 %v686
        %699 = vmatprep.subr.mxu0 0.0
        %700 = vmatpush1.msra.mxu0 %v685
        %701 = vmatprep.subr.mxu0 0.0
        %702 = vmatpush1.msra.mxu0 %v684
        %703 = vmatprep.subr.mxu0 0.0
        %704 = vmatpush1.msra.mxu0 %v683
        %705 = vmatprep.subr.mxu0 0.0
        %706 = vmatpush1.msra.mxu0 %v682
        %707 = vmatprep.subr.mxu0 0.0
        %708 = vmatpush1.msra.mxu0 %v681
        %709 = vmatprep.subr.mxu0 0.0
        %710 = vmatpush1.msra.mxu0 %v680
        %711 = vmatprep.subr.mxu0 0.0
        %712 = vmatpush1.msra.mxu0 %v679
        %713 = vmatprep.subr.mxu0 0.0
        %714 = vmatpush1.msra.mxu0 %v678
        %715 = vmatprep.subr.mxu0 0.0
        %716 = vmatpush1.msra.mxu0 %v677
        %717 = vmatprep.subr.mxu0 0.0
        %718 = vmatpush1.msra.mxu0 %v676
        %719 = vmatprep.subr.mxu0 0.0
        %720 = vmatpush1.msra.mxu0 %v675
        %721 = vmatprep.subr.mxu0 0.0
        %722 = vmatpush1.msra.mxu0 %v674
        %723 = vmatprep.subr.mxu0 0.0
        %724 = vmatpush1.msra.mxu0 %v673
        %725 = vmatprep.subr.mxu0 0.0
        %726 = vmatpush1.msra.mxu0 %v672
        %727 = vmatprep.subr.mxu0 0.0
        %728 = vmatpush2.msra.mxu0 0.0
        %729 = vmatprep.subr.mxu0 0.0
        %730 = vmatpush2.msra.mxu0 0.0
        %731 = vmatprep.subr.mxu0 0.0
        %732 = vmatpush2.msra.mxu0 0.0
        %733 = vmatprep.subr.mxu0 0.0
        %734 = vmatpush2.msra.mxu0 0.0
        %735 = vmatprep.subr.mxu0 0.0
        %736 = vmatpush2.msra.mxu0 0.0
        %737 = vmatprep.subr.mxu0 0.0
        %738 = vmatpush2.msra.mxu0 0.0
        %739 = vmatprep.subr.mxu0 0.0
        %740 = vmatpush2.msra.mxu0 0.0
        %741 = vmatprep.subr.mxu0 0.0
        %742 = vmatpush2.msra.mxu0 0.0
        %743 = vmatprep.subr.mxu0 0.0
        %744 = vmatpush2.msra.mxu0 0.0
        %745 = vmatprep.subr.mxu0 0.0
        %746 = vmatpush2.msra.mxu0 0.0
        %747 = vmatprep.subr.mxu0 0.0
        %748 = vmatpush2.msra.mxu0 0.0
        %749 = vmatprep.subr.mxu0 0.0
        %750 = vmatpush2.msra.mxu0 0.0
        %751 = vmatprep.subr.mxu0 0.0
        %752 = vmatpush2.msra.mxu0 0.0
        %753 = vmatprep.subr.mxu0 0.0
        %754 = vmatpush2.msra.mxu0 0.0
        %755 = vmatprep.subr.mxu0 0.0
        %756 = vmatpush2.msra.mxu0 0.0
        %757 = vmatprep.subr.mxu0 0.0
        %758 = vmatpush2.msra.mxu0 0.0
        %759 = vmatprep.mubr.f32.mxu0 0.0
        %760 = vmatmul.mubr.f32.gmra.mxu0 %v656
        %v761 = vpop.f32.mrf.mxu0
        %v762 = vadd.f32 %v693, %v761
        %v763 = vpop.f32.mrf.mxu0
        %764 = vmatprep.mubr.f32.mxu0 0.0
        %765 = vmatmul.mubr.f32.gmra.mxu0 %v657
        %v766 = vpop.f32.mrf.mxu0
        %v767 = vadd.f32 %v693, %v766
        %v768 = vpop.f32.mrf.mxu0
        %769 = vmatprep.mubr.f32.mxu0 0.0
        %770 = vmatmul.mubr.f32.gmra.mxu0 %v658
        %v771 = vpop.f32.mrf.mxu0
        %v772 = vadd.f32 %v693, %v771
        %v773 = vpop.f32.mrf.mxu0
        %774 = vmatprep.mubr.f32.mxu0 0.0
        %775 = vmatmul.mubr.f32.gmra.mxu0 %v659
        %v776 = vpop.f32.mrf.mxu0
        %v777 = vadd.f32 %v693, %v776
        %v778 = vpop.f32.mrf.mxu0
        %779 = vmatprep.mubr.f32.mxu0 0.0
        %780 = vmatmul.mubr.f32.gmra.mxu0 %v660
        %v781 = vpop.f32.mrf.mxu0
        %v782 = vadd.f32 %v693, %v781
        %v783 = vpop.f32.mrf.mxu0
        %784 = vmatprep.mubr.f32.mxu0 0.0
        %785 = vmatmul.mubr.f32.gmra.mxu0 %v661
        %v786 = vpop.f32.mrf.mxu0
        %v787 = vadd.f32 %v693, %v786
        %v788 = vpop.f32.mrf.mxu0
        %789 = vmatprep.mubr.f32.mxu0 0.0
        %790 = vmatmul.mubr.f32.gmra.mxu0 %v662
        %v791 = vpop.f32.mrf.mxu0
        %v792 = vadd.f32 %v693, %v791
        %v793 = vpop.f32.mrf.mxu0
        %794 = vmatprep.mubr.f32.mxu0 0.0
        %795 = vmatmul.mubr.f32.gmra.mxu0 %v663
        %v796 = vpop.f32.mrf.mxu0
        %v797 = vadd.f32 %v693, %v796
        %v798 = vpop.f32.mrf.mxu0
        %799 = vmatprep.mubr.f32.mxu0 0.0
        %800 = vmatmul.mubr.f32.gmra.mxu0 %v664
        %v801 = vpop.f32.mrf.mxu0
        %v802 = vadd.f32 %v693, %v801
        %v803 = vpop.f32.mrf.mxu0
        %804 = vmatprep.mubr.f32.mxu0 0.0
        %805 = vmatmul.mubr.f32.gmra.mxu0 %v665
        %v806 = vpop.f32.mrf.mxu0
        %v807 = vadd.f32 %v693, %v806
        %v808 = vpop.f32.mrf.mxu0
        %809 = vmatprep.mubr.f32.mxu0 0.0
        %810 = vmatmul.mubr.f32.gmra.mxu0 %v666
        %v811 = vpop.f32.mrf.mxu0
        %v812 = vadd.f32 %v693, %v811
        %v813 = vpop.f32.mrf.mxu0
        %814 = vmatprep.mubr.f32.mxu0 0.0
        %815 = vmatmul.mubr.f32.gmra.mxu0 %v667
        %v816 = vpop.f32.mrf.mxu0
        %v817 = vadd.f32 %v693, %v816
        %v818 = vpop.f32.mrf.mxu0
        %819 = vmatprep.mubr.f32.mxu0 0.0
        %820 = vmatmul.mubr.f32.gmra.mxu0 %v668
        %v821 = vpop.f32.mrf.mxu0
        %v822 = vadd.f32 %v693, %v821
        %v823 = vpop.f32.mrf.mxu0
        %824 = vmatprep.mubr.f32.mxu0 0.0
        %825 = vmatmul.mubr.f32.gmra.mxu0 %v669
        %v826 = vpop.f32.mrf.mxu0
        %v827 = vadd.f32 %v693, %v826
        %v828 = vpop.f32.mrf.mxu0
        %829 = vmatprep.mubr.f32.mxu0 0.0
        %830 = vmatmul.mubr.f32.gmra.mxu0 %v670
        %v831 = vpop.f32.mrf.mxu0
        %v832 = vadd.f32 %v693, %v831
        %v833 = vpop.f32.mrf.mxu0
        %834 = vmatprep.mubr.f32.mxu0 0.0
        %835 = vmatmul.mubr.f32.gmra.mxu0 %v671
        %v836 = vpop.f32.mrf.mxu0
        %v837 = vadd.f32 %v693, %v836
        %v838 = vpop.f32.mrf.mxu0
        %839 = vdwg.mxu0
        %vm840 = vcmask 31744
        %v841 = vsel %vm840, %v762, -inf
        %842 = vmax.xlane.f32.xlu0 %v841
        %v843 = vpop.xlane.xlu0 %842
        %v844 = vsel %vm840, %v767, -inf
        %845 = vmax.xlane.f32.xlu0 %v844
        %v846 = vpop.xlane.xlu0 %845
        %v847 = vsel %vm840, %v772, -inf
        %848 = vmax.xlane.f32.xlu0 %v847
        %v849 = vpop.xlane.xlu0 %848
        %v850 = vsel %vm840, %v777, -inf
        %851 = vmax.xlane.f32.xlu0 %v850
        %v852 = vpop.xlane.xlu0 %851
        %v853 = vsel %vm840, %v782, -inf
        %854 = vmax.xlane.f32.xlu0 %v853
        %v855 = vpop.xlane.xlu0 %854
        %v856 = vsel %vm840, %v787, -inf
        %857 = vmax.xlane.f32.xlu0 %v856
        %v858 = vpop.xlane.xlu0 %857
        %v859 = vsel %vm840, %v792, -inf
        %860 = vmax.xlane.f32.xlu0 %v859
        %v861 = vpop.xlane.xlu0 %860
        %v862 = vsel %vm840, %v797, -inf
        %863 = vmax.xlane.f32.xlu0 %v862
        %v864 = vpop.xlane.xlu0 %863
        %v865 = vsel %vm840, %v802, -inf
        %866 = vmax.xlane.f32.xlu0 %v865
        %v867 = vpop.xlane.xlu0 %866
        %v868 = vsel %vm840, %v807, -inf
        %869 = vmax.xlane.f32.xlu0 %v868
        %v870 = vpop.xlane.xlu0 %869
        %v871 = vsel %vm840, %v812, -inf
        %872 = vmax.xlane.f32.xlu0 %v871
        %v873 = vpop.xlane.xlu0 %872
        %v874 = vsel %vm840, %v817, -inf
        %875 = vmax.xlane.f32.xlu0 %v874
        %v876 = vpop.xlane.xlu0 %875
        %v877 = vsel %vm840, %v822, -inf
        %878 = vmax.xlane.f32.xlu0 %v877
        %v879 = vpop.xlane.xlu0 %878
        %v880 = vsel %vm840, %v827, -inf
        %881 = vmax.xlane.f32.xlu0 %v880
        %v882 = vpop.xlane.xlu0 %881
        %v883 = vsel %vm840, %v832, -inf
        %884 = vmax.xlane.f32.xlu0 %v883
        %v885 = vpop.xlane.xlu0 %884
        %v886 = vsel %vm840, %v837, -inf
        %887 = vmax.xlane.f32.xlu0 %v886
        %v888 = vpop.xlane.xlu0 %887
        %v889 = vsub.f32 %v762, %v843
        %v890 = vsub.f32 %v767, %v846
        %v891 = vsub.f32 %v772, %v849
        %v892 = vsub.f32 %v777, %v852
        %v893 = vsub.f32 %v782, %v855
        %v894 = vsub.f32 %v787, %v858
        %v895 = vsub.f32 %v792, %v861
        %v896 = vsub.f32 %v797, %v864
        %v897 = vsub.f32 %v802, %v867
        %v898 = vsub.f32 %v807, %v870
        %v899 = vsub.f32 %v812, %v873
        %v900 = vsub.f32 %v817, %v876
        %v901 = vsub.f32 %v822, %v879
        %v902 = vsub.f32 %v827, %v882
        %v903 = vsub.f32 %v832, %v885
        %v904 = vsub.f32 %v837, %v888
        %v905 = vmul.f32 %v889, 1.442695
        %v906 = vpow.pop %v905
        %v907 = vmul.f32 %v890, 1.442695
        %v908 = vpow.pop %v907
        %v909 = vmul.f32 %v891, 1.442695
        %v910 = vpow.pop %v909
        %v911 = vmul.f32 %v892, 1.442695
        %v912 = vpow.pop %v911
        %v913 = vmul.f32 %v893, 1.442695
        %v914 = vpow.pop %v913
        %v915 = vmul.f32 %v894, 1.442695
        %v916 = vpow.pop %v915
        %v917 = vmul.f32 %v895, 1.442695
        %v918 = vpow.pop %v917
        %v919 = vmul.f32 %v896, 1.442695
        %v920 = vpow.pop %v919
        %v921 = vmul.f32 %v897, 1.442695
        %v922 = vpow.pop %v921
        %v923 = vmul.f32 %v898, 1.442695
        %v924 = vpow.pop %v923
        %v925 = vmul.f32 %v899, 1.442695
        %v926 = vpow.pop %v925
        %v927 = vmul.f32 %v900, 1.442695
        %v928 = vpow.pop %v927
        %v929 = vmul.f32 %v901, 1.442695
        %v930 = vpow.pop %v929
        %v931 = vmul.f32 %v902, 1.442695
        %v932 = vpow.pop %v931
        %v933 = vmul.f32 %v903, 1.442695
        %v934 = vpow.pop %v933
        %v935 = vmul.f32 %v904, 1.442695
        %v936 = vpow.pop %v935
        %v937 = vsel %vm840, %v906, 0.0
        %938 = vadd.xlane.f32.xlu0 %v937
        %v939 = vpop.xlane.xlu0 %938
        %v940 = vsel %vm840, %v908, 0.0
        %941 = vadd.xlane.f32.xlu0 %v940
        %v942 = vpop.xlane.xlu0 %941
        %v943 = vsel %vm840, %v910, 0.0
        %944 = vadd.xlane.f32.xlu0 %v943
        %v945 = vpop.xlane.xlu0 %944
        %v946 = vsel %vm840, %v912, 0.0
        %947 = vadd.xlane.f32.xlu0 %v946
        %v948 = vpop.xlane.xlu0 %947
        %v949 = vsel %vm840, %v914, 0.0
        %950 = vadd.xlane.f32.xlu0 %v949
        %v951 = vpop.xlane.xlu0 %950
        %v952 = vsel %vm840, %v916, 0.0
        %953 = vadd.xlane.f32.xlu0 %v952
        %v954 = vpop.xlane.xlu0 %953
        %v955 = vsel %vm840, %v918, 0.0
        %956 = vadd.xlane.f32.xlu0 %v955
        %v957 = vpop.xlane.xlu0 %956
        %v958 = vsel %vm840, %v920, 0.0
        %959 = vadd.xlane.f32.xlu0 %v958
        %v960 = vpop.xlane.xlu0 %959
        %v961 = vsel %vm840, %v922, 0.0
        %962 = vadd.xlane.f32.xlu0 %v961
        %v963 = vpop.xlane.xlu0 %962
        %v964 = vsel %vm840, %v924, 0.0
        %965 = vadd.xlane.f32.xlu0 %v964
        %v966 = vpop.xlane.xlu0 %965
        %v967 = vsel %vm840, %v926, 0.0
        %968 = vadd.xlane.f32.xlu0 %v967
        %v969 = vpop.xlane.xlu0 %968
        %v970 = vsel %vm840, %v928, 0.0
        %971 = vadd.xlane.f32.xlu0 %v970
        %v972 = vpop.xlane.xlu0 %971
        %v973 = vsel %vm840, %v930, 0.0
        %974 = vadd.xlane.f32.xlu0 %v973
        %v975 = vpop.xlane.xlu0 %974
        %v976 = vsel %vm840, %v932, 0.0
        %977 = vadd.xlane.f32.xlu0 %v976
        %v978 = vpop.xlane.xlu0 %977
        %v979 = vsel %vm840, %v934, 0.0
        %980 = vadd.xlane.f32.xlu0 %v979
        %v981 = vpop.xlane.xlu0 %980
        %v982 = vsel %vm840, %v936, 0.0
        %983 = vadd.xlane.f32.xlu0 %v982
        %v984 = vpop.xlane.xlu0 %983
        %v985 = vrcp.pop %v939
        %v986 = vrcp.pop %v942
        %v987 = vrcp.pop %v945
        %v988 = vrcp.pop %v948
        %v989 = vrcp.pop %v951
        %v990 = vrcp.pop %v954
        %v991 = vrcp.pop %v957
        %v992 = vrcp.pop %v960
        %v993 = vrcp.pop %v963
        %v994 = vrcp.pop %v966
        %v995 = vrcp.pop %v969
        %v996 = vrcp.pop %v972
        %v997 = vrcp.pop %v975
        %v998 = vrcp.pop %v978
        %v999 = vrcp.pop %v981
        %v1000 = vrcp.pop %v984
        %v1001 = vmul.f32 %v906, %v985
        %v1002 = vmul.f32 %v908, %v986
        %v1003 = vmul.f32 %v910, %v987
        %v1004 = vmul.f32 %v912, %v988
        %v1005 = vmul.f32 %v914, %v989
        %v1006 = vmul.f32 %v916, %v990
        %v1007 = vmul.f32 %v918, %v991
        %v1008 = vmul.f32 %v920, %v992
        %v1009 = vmul.f32 %v922, %v993
        %v1010 = vmul.f32 %v924, %v994
        %v1011 = vmul.f32 %v926, %v995
        %v1012 = vmul.f32 %v928, %v996
        %v1013 = vmul.f32 %v930, %v997
        %v1014 = vmul.f32 %v932, %v998
        %v1015 = vmul.f32 %v934, %v999
        %v1016 = vmul.f32 %v936, %v1000
        %v1017 = vld [vmem:[#allocation8] sm:$0xff]
        %v1018 = vld [vmem:[#allocation8 + $0x8] sm:$0xff]
        %v1019 = vld [vmem:[#allocation8 + $0x10] sm:$0xff]
        %v1020 = vld [vmem:[#allocation8 + $0x18] sm:$0xff]
        %v1021 = vld [vmem:[#allocation8 + $0x20] sm:$0xff]
        %v1022 = vld [vmem:[#allocation8 + $0x28] sm:$0xff]
        %v1023 = vld [vmem:[#allocation8 + $0x30] sm:$0xff]
        %v1024 = vld [vmem:[#allocation8 + $0x38] sm:$0xff]
        %v1025 = vld [vmem:[#allocation8 + $0x40] sm:$0xff]
        %v1026 = vld [vmem:[#allocation8 + $0x48] sm:$0xff]
        %v1027 = vld [vmem:[#allocation8 + $0x50] sm:$0xff]
        %v1028 = vld [vmem:[#allocation8 + $0x58] sm:$0xff]
        %v1029 = vld [vmem:[#allocation8 + $0x60] sm:$0xff]
        %v1030 = vld [vmem:[#allocation8 + $0x68] sm:$0xff]
        %v1031 = vld [vmem:[#allocation8 + $0x70] sm:$0xff]
        %v1032 = vld [vmem:[#allocation8 + $0x78] sm:$0xff]
        %v1033 = vld [vmem:[#allocation8 + $0x80] sm:$0xff]
        %v1034 = vld [vmem:[#allocation8 + $0x88] sm:$0xff]
        %v1035 = vld [vmem:[#allocation8 + $0x90] sm:$0xff]
        %v1036 = vld [vmem:[#allocation8 + $0x98] sm:$0xff]
        %v1037 = vld [vmem:[#allocation8 + $0xa0] sm:$0xff]
        %v1038 = vld [vmem:[#allocation8 + $0xa8] sm:$0xff]
        %v1039 = vld [vmem:[#allocation8 + $0xb0] sm:$0xff]
        %v1040 = vld [vmem:[#allocation8 + $0xb8] sm:$0xff]
        %v1041 = vld [vmem:[#allocation8 + $0xc0] sm:$0xff]
        %v1042 = vld [vmem:[#allocation8 + $0xc8] sm:$0xff]
        %v1043 = vld [vmem:[#allocation8 + $0xd0] sm:$0xff]
        %v1044 = vld [vmem:[#allocation8 + $0xd8] sm:$0xff]
        %v1045 = vld [vmem:[#allocation8 + $0xe0] sm:$0xff]
        %v1046 = vld [vmem:[#allocation8 + $0xe8] sm:$0xff]
        %v1047 = vld [vmem:[#allocation8 + $0xf0] sm:$0xff]
        %v1048 = vld [vmem:[#allocation8 + $0xf8] sm:$0xff]
        %v1049 = vld [vmem:[#allocation8 + $0x100] sm:$0xff]
        %v1050 = vld [vmem:[#allocation8 + $0x108] sm:$0xff]
        %v1051 = vld [vmem:[#allocation8 + $0x110] sm:$0xff]
        %v1052 = vld [vmem:[#allocation8 + $0x118] sm:$0xff]
        %v1053 = vld [vmem:[#allocation8 + $0x120] sm:$0xff]
        %v1054 = vld [vmem:[#allocation8 + $0x128] sm:$0xff]
        %v1055 = vld [vmem:[#allocation8 + $0x130] sm:$0xff]
        %v1056 = vld [vmem:[#allocation8 + $0x138] sm:$0xff]
        %v1057 = vld [vmem:[#allocation8 + $0x140] sm:$0xff]
        %v1058 = vld [vmem:[#allocation8 + $0x148] sm:$0xff]
        %v1059 = vld [vmem:[#allocation8 + $0x150] sm:$0xff]
        %v1060 = vld [vmem:[#allocation8 + $0x158] sm:$0xff]
        %v1061 = vld [vmem:[#allocation8 + $0x160] sm:$0xff]
        %v1062 = vld [vmem:[#allocation8 + $0x168] sm:$0xff]
        %v1063 = vld [vmem:[#allocation8 + $0x170] sm:$0xff]
        %v1064 = vld [vmem:[#allocation8 + $0x178] sm:$0xff]
        %v1065 = vld [vmem:[#allocation8 + $0x180] sm:$0xff]
        %v1066 = vld [vmem:[#allocation8 + $0x188] sm:$0xff]
        %v1067 = vld [vmem:[#allocation8 + $0x190] sm:$0xff]
        %v1068 = vld [vmem:[#allocation8 + $0x198] sm:$0xff]
        %v1069 = vld [vmem:[#allocation8 + $0x1a0] sm:$0xff]
        %v1070 = vld [vmem:[#allocation8 + $0x1a8] sm:$0xff]
        %v1071 = vld [vmem:[#allocation8 + $0x1b0] sm:$0xff]
        %v1072 = vld [vmem:[#allocation8 + $0x1b8] sm:$0xff]
        %v1073 = vld [vmem:[#allocation8 + $0x1c0] sm:$0xff]
        %v1074 = vld [vmem:[#allocation8 + $0x1c8] sm:$0xff]
        %v1075 = vld [vmem:[#allocation8 + $0x1d0] sm:$0xff]
        %v1076 = vld [vmem:[#allocation8 + $0x1d8] sm:$0xff]
        %v1077 = vld [vmem:[#allocation8 + $0x1e0] sm:$0xff]
        %v1078 = vld [vmem:[#allocation8 + $0x1e8] sm:$0xff]
        %v1079 = vld [vmem:[#allocation8 + $0x1f0] sm:$0xff]
        %v1080 = vld [vmem:[#allocation8 + $0x1f8] sm:$0xff]
        %1081 = vmatprep.subr.mxu0 %v1078
        %1082 = vmatpush1.msra.mxu0 %v1077
        %1083 = vmatprep.subr.mxu0 %v1074
        %1084 = vmatpush1.msra.mxu0 %v1073
        %1085 = vmatprep.subr.mxu0 %v1070
        %1086 = vmatpush1.msra.mxu0 %v1069
        %1087 = vmatprep.subr.mxu0 %v1066
        %1088 = vmatpush1.msra.mxu0 %v1065
        %1089 = vmatprep.subr.mxu0 %v1062
        %1090 = vmatpush1.msra.mxu0 %v1061
        %1091 = vmatprep.subr.mxu0 %v1058
        %1092 = vmatpush1.msra.mxu0 %v1057
        %1093 = vmatprep.subr.mxu0 %v1054
        %1094 = vmatpush1.msra.mxu0 %v1053
        %1095 = vmatprep.subr.mxu0 %v1050
        %1096 = vmatpush1.msra.mxu0 %v1049
        %1097 = vmatprep.subr.mxu0 %v1046
        %1098 = vmatpush1.msra.mxu0 %v1045
        %1099 = vmatprep.subr.mxu0 %v1042
        %1100 = vmatpush1.msra.mxu0 %v1041
        %1101 = vmatprep.subr.mxu0 %v1038
        %1102 = vmatpush1.msra.mxu0 %v1037
        %1103 = vmatprep.subr.mxu0 %v1034
        %1104 = vmatpush1.msra.mxu0 %v1033
        %1105 = vmatprep.subr.mxu0 %v1030
        %1106 = vmatpush1.msra.mxu0 %v1029
        %1107 = vmatprep.subr.mxu0 %v1026
        %1108 = vmatpush1.msra.mxu0 %v1025
        %1109 = vmatprep.subr.mxu0 %v1022
        %1110 = vmatpush1.msra.mxu0 %v1021
        %1111 = vmatprep.subr.mxu0 %v1018
        %1112 = vmatpush1.msra.mxu0 %v1017
        %1113 = vmatprep.subr.mxu0 0.0
        %1114 = vmatpush2.msra.mxu0 0.0
        %1115 = vmatprep.subr.mxu0 0.0
        %1116 = vmatpush2.msra.mxu0 0.0
        %1117 = vmatprep.subr.mxu0 0.0
        %1118 = vmatpush2.msra.mxu0 0.0
        %1119 = vmatprep.subr.mxu0 0.0
        %1120 = vmatpush2.msra.mxu0 0.0
        %1121 = vmatprep.subr.mxu0 0.0
        %1122 = vmatpush2.msra.mxu0 0.0
        %1123 = vmatprep.subr.mxu0 0.0
        %1124 = vmatpush2.msra.mxu0 0.0
        %1125 = vmatprep.subr.mxu0 0.0
        %1126 = vmatpush2.msra.mxu0 0.0
        %1127 = vmatprep.subr.mxu0 0.0
        %1128 = vmatpush2.msra.mxu0 0.0
        %1129 = vmatprep.subr.mxu0 0.0
        %1130 = vmatpush2.msra.mxu0 0.0
        %1131 = vmatprep.subr.mxu0 0.0
        %1132 = vmatpush2.msra.mxu0 0.0
        %1133 = vmatprep.subr.mxu0 0.0
        %1134 = vmatpush2.msra.mxu0 0.0
        %1135 = vmatprep.subr.mxu0 0.0
        %1136 = vmatpush2.msra.mxu0 0.0
        %1137 = vmatprep.subr.mxu0 0.0
        %1138 = vmatpush2.msra.mxu0 0.0
        %1139 = vmatprep.subr.mxu0 0.0
        %1140 = vmatpush2.msra.mxu0 0.0
        %1141 = vmatprep.subr.mxu0 0.0
        %1142 = vmatpush2.msra.mxu0 0.0
        %1143 = vmatprep.subr.mxu0 0.0
        %1144 = vmatpush2.msra.mxu0 0.0
        %1145 = vmatprep.mubr.f32.mxu0 0.0
        %1146 = vmatmul.mubr.f32.gmra.mxu0 %v424
        %v1147 = vpop.f32.mrf.mxu0
        %v1148 = vadd.f32 0.0, %v1147
        %v1149 = vpop.f32.mrf.mxu0
        %v1150 = vadd.f32 0.0, %v1149
        %1151 = vmatprep.mubr.f32.mxu0 0.0
        %1152 = vmatmul.mubr.f32.gmra.mxu0 %v425
        %v1153 = vpop.f32.mrf.mxu0
        %v1154 = vadd.f32 0.0, %v1153
        %v1155 = vpop.f32.mrf.mxu0
        %v1156 = vadd.f32 0.0, %v1155
        %1157 = vmatprep.mubr.f32.mxu0 0.0
        %1158 = vmatmul.mubr.f32.gmra.mxu0 %v426
        %v1159 = vpop.f32.mrf.mxu0
        %v1160 = vadd.f32 0.0, %v1159
        %v1161 = vpop.f32.mrf.mxu0
        %v1162 = vadd.f32 0.0, %v1161
        %1163 = vmatprep.mubr.f32.mxu0 0.0
        %1164 = vmatmul.mubr.f32.gmra.mxu0 %v427
        %v1165 = vpop.f32.mrf.mxu0
        %v1166 = vadd.f32 0.0, %v1165
        %v1167 = vpop.f32.mrf.mxu0
        %v1168 = vadd.f32 0.0, %v1167
        %1169 = vmatprep.mubr.f32.mxu0 0.0
        %1170 = vmatmul.mubr.f32.gmra.mxu0 %v428
        %v1171 = vpop.f32.mrf.mxu0
        %v1172 = vadd.f32 0.0, %v1171
        %v1173 = vpop.f32.mrf.mxu0
        %v1174 = vadd.f32 0.0, %v1173
        %1175 = vmatprep.mubr.f32.mxu0 0.0
        %1176 = vmatmul.mubr.f32.gmra.mxu0 %v429
        %v1177 = vpop.f32.mrf.mxu0
        %v1178 = vadd.f32 0.0, %v1177
        %v1179 = vpop.f32.mrf.mxu0
        %v1180 = vadd.f32 0.0, %v1179
        %1181 = vmatprep.mubr.f32.mxu0 0.0
        %1182 = vmatmul.mubr.f32.gmra.mxu0 %v430
        %v1183 = vpop.f32.mrf.mxu0
        %v1184 = vadd.f32 0.0, %v1183
        %v1185 = vpop.f32.mrf.mxu0
        %v1186 = vadd.f32 0.0, %v1185
        %1187 = vmatprep.mubr.f32.mxu0 0.0
        %1188 = vmatmul.mubr.f32.gmra.mxu0 %v431
        %v1189 = vpop.f32.mrf.mxu0
        %v1190 = vadd.f32 0.0, %v1189
        %v1191 = vpop.f32.mrf.mxu0
        %v1192 = vadd.f32 0.0, %v1191
        %1193 = vmatprep.mubr.f32.mxu0 0.0
        %1194 = vmatmul.mubr.f32.gmra.mxu0 %v432
        %v1195 = vpop.f32.mrf.mxu0
        %v1196 = vadd.f32 0.0, %v1195
        %v1197 = vpop.f32.mrf.mxu0
        %v1198 = vadd.f32 0.0, %v1197
        %1199 = vmatprep.mubr.f32.mxu0 0.0
        %1200 = vmatmul.mubr.f32.gmra.mxu0 %v433
        %v1201 = vpop.f32.mrf.mxu0
        %v1202 = vadd.f32 0.0, %v1201
        %v1203 = vpop.f32.mrf.mxu0
        %v1204 = vadd.f32 0.0, %v1203
        %1205 = vmatprep.mubr.f32.mxu0 0.0
        %1206 = vmatmul.mubr.f32.gmra.mxu0 %v434
        %v1207 = vpop.f32.mrf.mxu0
        %v1208 = vadd.f32 0.0, %v1207
        %v1209 = vpop.f32.mrf.mxu0
        %v1210 = vadd.f32 0.0, %v1209
        %1211 = vmatprep.mubr.f32.mxu0 0.0
        %1212 = vmatmul.mubr.f32.gmra.mxu0 %v435
        %v1213 = vpop.f32.mrf.mxu0
        %v1214 = vadd.f32 0.0, %v1213
        %v1215 = vpop.f32.mrf.mxu0
        %v1216 = vadd.f32 0.0, %v1215
        %1217 = vmatprep.mubr.f32.mxu0 0.0
        %1218 = vmatmul.mubr.f32.gmra.mxu0 %v436
        %v1219 = vpop.f32.mrf.mxu0
        %v1220 = vadd.f32 0.0, %v1219
        %v1221 = vpop.f32.mrf.mxu0
        %v1222 = vadd.f32 0.0, %v1221
        %1223 = vmatprep.mubr.f32.mxu0 0.0
        %1224 = vmatmul.mubr.f32.gmra.mxu0 %v437
        %v1225 = vpop.f32.mrf.mxu0
        %v1226 = vadd.f32 0.0, %v1225
        %v1227 = vpop.f32.mrf.mxu0
        %v1228 = vadd.f32 0.0, %v1227
        %1229 = vmatprep.mubr.f32.mxu0 0.0
        %1230 = vmatmul.mubr.f32.gmra.mxu0 %v438
        %v1231 = vpop.f32.mrf.mxu0
        %v1232 = vadd.f32 0.0, %v1231
        %v1233 = vpop.f32.mrf.mxu0
        %v1234 = vadd.f32 0.0, %v1233
        %1235 = vmatprep.mubr.f32.mxu0 0.0
        %1236 = vmatmul.mubr.f32.gmra.mxu0 %v439
        %v1237 = vpop.f32.mrf.mxu0
        %v1238 = vadd.f32 0.0, %v1237
        %v1239 = vpop.f32.mrf.mxu0
        %v1240 = vadd.f32 0.0, %v1239
        %1241 = vdwg.mxu0
        %1242 = vmatprep.subr.mxu0 %v1080
        %1243 = vmatpush1.msra.mxu0 %v1079
        %1244 = vmatprep.subr.mxu0 %v1076
        %1245 = vmatpush1.msra.mxu0 %v1075
        %1246 = vmatprep.subr.mxu0 %v1072
        %1247 = vmatpush1.msra.mxu0 %v1071
        %1248 = vmatprep.subr.mxu0 %v1068
        %1249 = vmatpush1.msra.mxu0 %v1067
        %1250 = vmatprep.subr.mxu0 %v1064
        %1251 = vmatpush1.msra.mxu0 %v1063
        %1252 = vmatprep.subr.mxu0 %v1060
        %1253 = vmatpush1.msra.mxu0 %v1059
        %1254 = vmatprep.subr.mxu0 %v1056
        %1255 = vmatpush1.msra.mxu0 %v1055
        %1256 = vmatprep.subr.mxu0 %v1052
        %1257 = vmatpush1.msra.mxu0 %v1051
        %1258 = vmatprep.subr.mxu0 %v1048
        %1259 = vmatpush1.msra.mxu0 %v1047
        %1260 = vmatprep.subr.mxu0 %v1044
        %1261 = vmatpush1.msra.mxu0 %v1043
        %1262 = vmatprep.subr.mxu0 %v1040
        %1263 = vmatpush1.msra.mxu0 %v1039
        %1264 = vmatprep.subr.mxu0 %v1036
        %1265 = vmatpush1.msra.mxu0 %v1035
        %1266 = vmatprep.subr.mxu0 %v1032
        %1267 = vmatpush1.msra.mxu0 %v1031
        %1268 = vmatprep.subr.mxu0 %v1028
        %1269 = vmatpush1.msra.mxu0 %v1027
        %1270 = vmatprep.subr.mxu0 %v1024
        %1271 = vmatpush1.msra.mxu0 %v1023
        %1272 = vmatprep.subr.mxu0 %v1020
        %1273 = vmatpush1.msra.mxu0 %v1019
        %1274 = vmatprep.subr.mxu0 0.0
        %1275 = vmatpush2.msra.mxu0 0.0
        %1276 = vmatprep.subr.mxu0 0.0
        %1277 = vmatpush2.msra.mxu0 0.0
        %1278 = vmatprep.subr.mxu0 0.0
        %1279 = vmatpush2.msra.mxu0 0.0
        %1280 = vmatprep.subr.mxu0 0.0
        %1281 = vmatpush2.msra.mxu0 0.0
        %1282 = vmatprep.subr.mxu0 0.0
        %1283 = vmatpush2.msra.mxu0 0.0
        %1284 = vmatprep.subr.mxu0 0.0
        %1285 = vmatpush2.msra.mxu0 0.0
        %1286 = vmatprep.subr.mxu0 0.0
        %1287 = vmatpush2.msra.mxu0 0.0
        %1288 = vmatprep.subr.mxu0 0.0
        %1289 = vmatpush2.msra.mxu0 0.0
        %1290 = vmatprep.subr.mxu0 0.0
        %1291 = vmatpush2.msra.mxu0 0.0
        %1292 = vmatprep.subr.mxu0 0.0
        %1293 = vmatpush2.msra.mxu0 0.0
        %1294 = vmatprep.subr.mxu0 0.0
        %1295 = vmatpush2.msra.mxu0 0.0
        %1296 = vmatprep.subr.mxu0 0.0
        %1297 = vmatpush2.msra.mxu0 0.0
        %1298 = vmatprep.subr.mxu0 0.0
        %1299 = vmatpush2.msra.mxu0 0.0
        %1300 = vmatprep.subr.mxu0 0.0
        %1301 = vmatpush2.msra.mxu0 0.0
        %1302 = vmatprep.subr.mxu0 0.0
        %1303 = vmatpush2.msra.mxu0 0.0
        %1304 = vmatprep.subr.mxu0 0.0
        %1305 = vmatpush2.msra.mxu0 0.0
        %1306 = vmatprep.mubr.f32.mxu0 0.0
        %1307 = vmatmul.mubr.f32.gmra.mxu0 %v424
        %v1308 = vpop.f32.mrf.mxu0
        %v1309 = vadd.f32 0.0, %v1308
        %v1310 = vpop.f32.mrf.mxu0
        %v1311 = vadd.f32 0.0, %v1310
        %1312 = vmatprep.mubr.f32.mxu0 0.0
        %1313 = vmatmul.mubr.f32.gmra.mxu0 %v425
        %v1314 = vpop.f32.mrf.mxu0
        %v1315 = vadd.f32 0.0, %v1314
        %v1316 = vpop.f32.mrf.mxu0
        %v1317 = vadd.f32 0.0, %v1316
        %1318 = vmatprep.mubr.f32.mxu0 0.0
        %1319 = vmatmul.mubr.f32.gmra.mxu0 %v426
        %v1320 = vpop.f32.mrf.mxu0
        %v1321 = vadd.f32 0.0, %v1320
        %v1322 = vpop.f32.mrf.mxu0
        %v1323 = vadd.f32 0.0, %v1322
        %1324 = vmatprep.mubr.f32.mxu0 0.0
        %1325 = vmatmul.mubr.f32.gmra.mxu0 %v427
        %v1326 = vpop.f32.mrf.mxu0
        %v1327 = vadd.f32 0.0, %v1326
        %v1328 = vpop.f32.mrf.mxu0
        %v1329 = vadd.f32 0.0, %v1328
        %1330 = vmatprep.mubr.f32.mxu0 0.0
        %1331 = vmatmul.mubr.f32.gmra.mxu0 %v428
        %v1332 = vpop.f32.mrf.mxu0
        %v1333 = vadd.f32 0.0, %v1332
        %v1334 = vpop.f32.mrf.mxu0
        %v1335 = vadd.f32 0.0, %v1334
        %1336 = vmatprep.mubr.f32.mxu0 0.0
        %1337 = vmatmul.mubr.f32.gmra.mxu0 %v429
        %v1338 = vpop.f32.mrf.mxu0
        %v1339 = vadd.f32 0.0, %v1338
        %v1340 = vpop.f32.mrf.mxu0
        %v1341 = vadd.f32 0.0, %v1340
        %1342 = vmatprep.mubr.f32.mxu0 0.0
        %1343 = vmatmul.mubr.f32.gmra.mxu0 %v430
        %v1344 = vpop.f32.mrf.mxu0
        %v1345 = vadd.f32 0.0, %v1344
        %v1346 = vpop.f32.mrf.mxu0
        %v1347 = vadd.f32 0.0, %v1346
        %1348 = vmatprep.mubr.f32.mxu0 0.0
        %1349 = vmatmul.mubr.f32.gmra.mxu0 %v431
        %v1350 = vpop.f32.mrf.mxu0
        %v1351 = vadd.f32 0.0, %v1350
        %v1352 = vpop.f32.mrf.mxu0
        %v1353 = vadd.f32 0.0, %v1352
        %1354 = vmatprep.mubr.f32.mxu0 0.0
        %1355 = vmatmul.mubr.f32.gmra.mxu0 %v432
        %v1356 = vpop.f32.mrf.mxu0
        %v1357 = vadd.f32 0.0, %v1356
        %v1358 = vpop.f32.mrf.mxu0
        %v1359 = vadd.f32 0.0, %v1358
        %1360 = vmatprep.mubr.f32.mxu0 0.0
        %1361 = vmatmul.mubr.f32.gmra.mxu0 %v433
        %v1362 = vpop.f32.mrf.mxu0
        %v1363 = vadd.f32 0.0, %v1362
        %v1364 = vpop.f32.mrf.mxu0
        %v1365 = vadd.f32 0.0, %v1364
        %1366 = vmatprep.mubr.f32.mxu0 0.0
        %1367 = vmatmul.mubr.f32.gmra.mxu0 %v434
        %v1368 = vpop.f32.mrf.mxu0
        %v1369 = vadd.f32 0.0, %v1368
        %v1370 = vpop.f32.mrf.mxu0
        %v1371 = vadd.f32 0.0, %v1370
        %1372 = vmatprep.mubr.f32.mxu0 0.0
        %1373 = vmatmul.mubr.f32.gmra.mxu0 %v435
        %v1374 = vpop.f32.mrf.mxu0
        %v1375 = vadd.f32 0.0, %v1374
        %v1376 = vpop.f32.mrf.mxu0
        %v1377 = vadd.f32 0.0, %v1376
        %1378 = vmatprep.mubr.f32.mxu0 0.0
        %1379 = vmatmul.mubr.f32.gmra.mxu0 %v436
        %v1380 = vpop.f32.mrf.mxu0
        %v1381 = vadd.f32 0.0, %v1380
        %v1382 = vpop.f32.mrf.mxu0
        %v1383 = vadd.f32 0.0, %v1382
        %1384 = vmatprep.mubr.f32.mxu0 0.0
        %1385 = vmatmul.mubr.f32.gmra.mxu0 %v437
        %v1386 = vpop.f32.mrf.mxu0
        %v1387 = vadd.f32 0.0, %v1386
        %v1388 = vpop.f32.mrf.mxu0
        %v1389 = vadd.f32 0.0, %v1388
        %1390 = vmatprep.mubr.f32.mxu0 0.0
        %1391 = vmatmul.mubr.f32.gmra.mxu0 %v438
        %v1392 = vpop.f32.mrf.mxu0
        %v1393 = vadd.f32 0.0, %v1392
        %v1394 = vpop.f32.mrf.mxu0
        %v1395 = vadd.f32 0.0, %v1394
        %1396 = vmatprep.mubr.f32.mxu0 0.0
        %1397 = vmatmul.mubr.f32.gmra.mxu0 %v439
        %v1398 = vpop.f32.mrf.mxu0
        %v1399 = vadd.f32 0.0, %v1398
        %v1400 = vpop.f32.mrf.mxu0
        %v1401 = vadd.f32 0.0, %v1400
        %1402 = vdwg.mxu0
        %1404 = vset.pattern.permute.xlu0 0
        %1405 = vperm.xlu0 %1404, %v1001
        %v1406 = vpop.permute.xlu0 %1405
        %1409 = vset.pattern.permute.xlu0 0
        %1410 = vperm.xlu0 %1409, %v1002
        %v1411 = vpop.permute.xlu0 %1410
        %1414 = vset.pattern.permute.xlu0 0
        %1415 = vperm.xlu0 %1414, %v1003
        %v1416 = vpop.permute.xlu0 %1415
        %1419 = vset.pattern.permute.xlu0 0
        %1420 = vperm.xlu0 %1419, %v1004
        %v1421 = vpop.permute.xlu0 %1420
        %1424 = vset.pattern.permute.xlu0 0
        %1425 = vperm.xlu0 %1424, %v1005
        %v1426 = vpop.permute.xlu0 %1425
        %1429 = vset.pattern.permute.xlu0 0
        %1430 = vperm.xlu0 %1429, %v1006
        %v1431 = vpop.permute.xlu0 %1430
        %1434 = vset.pattern.permute.xlu0 0
        %1435 = vperm.xlu0 %1434, %v1007
        %v1436 = vpop.permute.xlu0 %1435
        %1439 = vset.pattern.permute.xlu0 0
        %1440 = vperm.xlu0 %1439, %v1008
        %v1441 = vpop.permute.xlu0 %1440
        %1444 = vset.pattern.permute.xlu0 0
        %1445 = vperm.xlu0 %1444, %v1009
        %v1446 = vpop.permute.xlu0 %1445
        %1449 = vset.pattern.permute.xlu0 0
        %1450 = vperm.xlu0 %1449, %v1010
        %v1451 = vpop.permute.xlu0 %1450
        %1454 = vset.pattern.permute.xlu0 0
        %1455 = vperm.xlu0 %1454, %v1011
        %v1456 = vpop.permute.xlu0 %1455
        %1459 = vset.pattern.permute.xlu0 0
        %1460 = vperm.xlu0 %1459, %v1012
        %v1461 = vpop.permute.xlu0 %1460
        %1464 = vset.pattern.permute.xlu0 0
        %1465 = vperm.xlu0 %1464, %v1013
        %v1466 = vpop.permute.xlu0 %1465
        %1469 = vset.pattern.permute.xlu0 0
        %1470 = vperm.xlu0 %1469, %v1014
        %v1471 = vpop.permute.xlu0 %1470
        %1474 = vset.pattern.permute.xlu0 0
        %1475 = vperm.xlu0 %1474, %v1015
        %v1476 = vpop.permute.xlu0 %1475
        %1479 = vset.pattern.permute.xlu0 0
        %1480 = vperm.xlu0 %1479, %v1016
        %v1481 = vpop.permute.xlu0 %1480
        %v1483 = vmul.f32 %v1406, %v1148
        %v1484 = vmul.f32 %v1411, %v1154
        %v1485 = vmul.f32 %v1416, %v1160
        %v1486 = vmul.f32 %v1421, %v1166
        %v1487 = vmul.f32 %v1426, %v1172
        %v1488 = vmul.f32 %v1431, %v1178
        %v1489 = vmul.f32 %v1436, %v1184
        %v1490 = vmul.f32 %v1441, %v1190
        %v1491 = vmul.f32 %v1446, %v1196
        %v1492 = vmul.f32 %v1451, %v1202
        %v1493 = vmul.f32 %v1456, %v1208
        %v1494 = vmul.f32 %v1461, %v1214
        %v1495 = vmul.f32 %v1466, %v1220
        %v1496 = vmul.f32 %v1471, %v1226
        %v1497 = vmul.f32 %v1476, %v1232
        %v1498 = vmul.f32 %v1481, %v1238
        %1499 = vset.pattern.permute.xlu0 1
        %1500 = vperm.xlu0 %1499, %v1001
        %v1501 = vpop.permute.xlu0 %1500
        %1503 = vset.pattern.permute.xlu0 1
        %1504 = vperm.xlu0 %1503, %v1002
        %v1505 = vpop.permute.xlu0 %1504
        %1507 = vset.pattern.permute.xlu0 1
        %1508 = vperm.xlu0 %1507, %v1003
        %v1509 = vpop.permute.xlu0 %1508
        %1511 = vset.pattern.permute.xlu0 1
        %1512 = vperm.xlu0 %1511, %v1004
        %v1513 = vpop.permute.xlu0 %1512
        %1515 = vset.pattern.permute.xlu0 1
        %1516 = vperm.xlu0 %1515, %v1005
        %v1517 = vpop.permute.xlu0 %1516
        %1519 = vset.pattern.permute.xlu0 1
        %1520 = vperm.xlu0 %1519, %v1006
        %v1521 = vpop.permute.xlu0 %1520
        %1523 = vset.pattern.permute.xlu0 1
        %1524 = vperm.xlu0 %1523, %v1007
        %v1525 = vpop.permute.xlu0 %1524
        %1527 = vset.pattern.permute.xlu0 1
        %1528 = vperm.xlu0 %1527, %v1008
        %v1529 = vpop.permute.xlu0 %1528
        %1531 = vset.pattern.permute.xlu0 1
        %1532 = vperm.xlu0 %1531, %v1009
        %v1533 = vpop.permute.xlu0 %1532
        %1535 = vset.pattern.permute.xlu0 1
        %1536 = vperm.xlu0 %1535, %v1010
        %v1537 = vpop.permute.xlu0 %1536
        %1539 = vset.pattern.permute.xlu0 1
        %1540 = vperm.xlu0 %1539, %v1011
        %v1541 = vpop.permute.xlu0 %1540
        %1543 = vset.pattern.permute.xlu0 1
        %1544 = vperm.xlu0 %1543, %v1012
        %v1545 = vpop.permute.xlu0 %1544
        %1547 = vset.pattern.permute.xlu0 1
        %1548 = vperm.xlu0 %1547, %v1013
        %v1549 = vpop.permute.xlu0 %1548
        %1551 = vset.pattern.permute.xlu0 1
        %1552 = vperm.xlu0 %1551, %v1014
        %v1553 = vpop.permute.xlu0 %1552
        %1555 = vset.pattern.permute.xlu0 1
        %1556 = vperm.xlu0 %1555, %v1015
        %v1557 = vpop.permute.xlu0 %1556
        %1559 = vset.pattern.permute.xlu0 1
        %1560 = vperm.xlu0 %1559, %v1016
        %v1561 = vpop.permute.xlu0 %1560
        %v1563 = vmul.f32 %v1501, %v1150
        %v1564 = vmul.f32 %v1505, %v1156
        %v1565 = vmul.f32 %v1509, %v1162
        %v1566 = vmul.f32 %v1513, %v1168
        %v1567 = vmul.f32 %v1517, %v1174
        %v1568 = vmul.f32 %v1521, %v1180
        %v1569 = vmul.f32 %v1525, %v1186
        %v1570 = vmul.f32 %v1529, %v1192
        %v1571 = vmul.f32 %v1533, %v1198
        %v1572 = vmul.f32 %v1537, %v1204
        %v1573 = vmul.f32 %v1541, %v1210
        %v1574 = vmul.f32 %v1545, %v1216
        %v1575 = vmul.f32 %v1549, %v1222
        %v1576 = vmul.f32 %v1553, %v1228
        %v1577 = vmul.f32 %v1557, %v1234
        %v1578 = vmul.f32 %v1561, %v1240
        %v1579 = vadd.f32 %v1483, %v1563
        %v1580 = vadd.f32 %v1484, %v1564
        %v1581 = vadd.f32 %v1485, %v1565
        %v1582 = vadd.f32 %v1486, %v1566
        %v1583 = vadd.f32 %v1487, %v1567
        %v1584 = vadd.f32 %v1488, %v1568
        %v1585 = vadd.f32 %v1489, %v1569
        %v1586 = vadd.f32 %v1490, %v1570
        %v1587 = vadd.f32 %v1491, %v1571
        %v1588 = vadd.f32 %v1492, %v1572
        %v1589 = vadd.f32 %v1493, %v1573
        %v1590 = vadd.f32 %v1494, %v1574
        %v1591 = vadd.f32 %v1495, %v1575
        %v1592 = vadd.f32 %v1496, %v1576
        %v1593 = vadd.f32 %v1497, %v1577
        %v1594 = vadd.f32 %v1498, %v1578
        %1595 = vset.pattern.permute.xlu0 2
        %1596 = vperm.xlu0 %1595, %v1001
        %v1597 = vpop.permute.xlu0 %1596
        %1599 = vset.pattern.permute.xlu0 2
        %1600 = vperm.xlu0 %1599, %v1002
        %v1601 = vpop.permute.xlu0 %1600
        %1603 = vset.pattern.permute.xlu0 2
        %1604 = vperm.xlu0 %1603, %v1003
        %v1605 = vpop.permute.xlu0 %1604
        %1607 = vset.pattern.permute.xlu0 2
        %1608 = vperm.xlu0 %1607, %v1004
        %v1609 = vpop.permute.xlu0 %1608
        %1611 = vset.pattern.permute.xlu0 2
        %1612 = vperm.xlu0 %1611, %v1005
        %v1613 = vpop.permute.xlu0 %1612
        %1615 = vset.pattern.permute.xlu0 2
        %1616 = vperm.xlu0 %1615, %v1006
        %v1617 = vpop.permute.xlu0 %1616
        %1619 = vset.pattern.permute.xlu0 2
        %1620 = vperm.xlu0 %1619, %v1007
        %v1621 = vpop.permute.xlu0 %1620
        %1623 = vset.pattern.permute.xlu0 2
        %1624 = vperm.xlu0 %1623, %v1008
        %v1625 = vpop.permute.xlu0 %1624
        %1627 = vset.pattern.permute.xlu0 2
        %1628 = vperm.xlu0 %1627, %v1009
        %v1629 = vpop.permute.xlu0 %1628
        %1631 = vset.pattern.permute.xlu0 2
        %1632 = vperm.xlu0 %1631, %v1010
        %v1633 = vpop.permute.xlu0 %1632
        %1635 = vset.pattern.permute.xlu0 2
        %1636 = vperm.xlu0 %1635, %v1011
        %v1637 = vpop.permute.xlu0 %1636
        %1639 = vset.pattern.permute.xlu0 2
        %1640 = vperm.xlu0 %1639, %v1012
        %v1641 = vpop.permute.xlu0 %1640
        %1643 = vset.pattern.permute.xlu0 2
        %1644 = vperm.xlu0 %1643, %v1013
        %v1645 = vpop.permute.xlu0 %1644
        %1647 = vset.pattern.permute.xlu0 2
        %1648 = vperm.xlu0 %1647, %v1014
        %v1649 = vpop.permute.xlu0 %1648
        %1651 = vset.pattern.permute.xlu0 2
        %1652 = vperm.xlu0 %1651, %v1015
        %v1653 = vpop.permute.xlu0 %1652
        %1655 = vset.pattern.permute.xlu0 2
        %1656 = vperm.xlu0 %1655, %v1016
        %v1657 = vpop.permute.xlu0 %1656
        %v1659 = vmul.f32 %v1597, %v1309
        %v1660 = vmul.f32 %v1601, %v1315
        %v1661 = vmul.f32 %v1605, %v1321
        %v1662 = vmul.f32 %v1609, %v1327
        %v1663 = vmul.f32 %v1613, %v1333
        %v1664 = vmul.f32 %v1617, %v1339
        %v1665 = vmul.f32 %v1621, %v1345
        %v1666 = vmul.f32 %v1625, %v1351
        %v1667 = vmul.f32 %v1629, %v1357
        %v1668 = vmul.f32 %v1633, %v1363
        %v1669 = vmul.f32 %v1637, %v1369
        %v1670 = vmul.f32 %v1641, %v1375
        %v1671 = vmul.f32 %v1645, %v1381
        %v1672 = vmul.f32 %v1649, %v1387
        %v1673 = vmul.f32 %v1653, %v1393
        %v1674 = vmul.f32 %v1657, %v1399
        %v1675 = vadd.f32 %v1579, %v1659
        %v1676 = vadd.f32 %v1580, %v1660
        %v1677 = vadd.f32 %v1581, %v1661
        %v1678 = vadd.f32 %v1582, %v1662
        %v1679 = vadd.f32 %v1583, %v1663
        %v1680 = vadd.f32 %v1584, %v1664
        %v1681 = vadd.f32 %v1585, %v1665
        %v1682 = vadd.f32 %v1586, %v1666
        %v1683 = vadd.f32 %v1587, %v1667
        %v1684 = vadd.f32 %v1588, %v1668
        %v1685 = vadd.f32 %v1589, %v1669
        %v1686 = vadd.f32 %v1590, %v1670
        %v1687 = vadd.f32 %v1591, %v1671
        %v1688 = vadd.f32 %v1592, %v1672
        %v1689 = vadd.f32 %v1593, %v1673
        %v1690 = vadd.f32 %v1594, %v1674
        %1691 = vset.pattern.permute.xlu0 3
        %1692 = vperm.xlu0 %1691, %v1001
        %v1693 = vpop.permute.xlu0 %1692
        %1695 = vset.pattern.permute.xlu0 3
        %1696 = vperm.xlu0 %1695, %v1002
        %v1697 = vpop.permute.xlu0 %1696
        %1699 = vset.pattern.permute.xlu0 3
        %1700 = vperm.xlu0 %1699, %v1003
        %v1701 = vpop.permute.xlu0 %1700
        %1703 = vset.pattern.permute.xlu0 3
        %1704 = vperm.xlu0 %1703, %v1004
        %v1705 = vpop.permute.xlu0 %1704
        %1707 = vset.pattern.permute.xlu0 3
        %1708 = vperm.xlu0 %1707, %v1005
        %v1709 = vpop.permute.xlu0 %1708
        %1711 = vset.pattern.permute.xlu0 3
        %1712 = vperm.xlu0 %1711, %v1006
        %v1713 = vpop.permute.xlu0 %1712
        %1715 = vset.pattern.permute.xlu0 3
        %1716 = vperm.xlu0 %1715, %v1007
        %v1717 = vpop.permute.xlu0 %1716
        %1719 = vset.pattern.permute.xlu0 3
        %1720 = vperm.xlu0 %1719, %v1008
        %v1721 = vpop.permute.xlu0 %1720
        %1723 = vset.pattern.permute.xlu0 3
        %1724 = vperm.xlu0 %1723, %v1009
        %v1725 = vpop.permute.xlu0 %1724
        %1727 = vset.pattern.permute.xlu0 3
        %1728 = vperm.xlu0 %1727, %v1010
        %v1729 = vpop.permute.xlu0 %1728
        %1731 = vset.pattern.permute.xlu0 3
        %1732 = vperm.xlu0 %1731, %v1011
        %v1733 = vpop.permute.xlu0 %1732
        %1735 = vset.pattern.permute.xlu0 3
        %1736 = vperm.xlu0 %1735, %v1012
        %v1737 = vpop.permute.xlu0 %1736
        %1739 = vset.pattern.permute.xlu0 3
        %1740 = vperm.xlu0 %1739, %v1013
        %v1741 = vpop.permute.xlu0 %1740
        %1743 = vset.pattern.permute.xlu0 3
        %1744 = vperm.xlu0 %1743, %v1014
        %v1745 = vpop.permute.xlu0 %1744
        %1747 = vset.pattern.permute.xlu0 3
        %1748 = vperm.xlu0 %1747, %v1015
        %v1749 = vpop.permute.xlu0 %1748
        %1751 = vset.pattern.permute.xlu0 3
        %1752 = vperm.xlu0 %1751, %v1016
        %v1753 = vpop.permute.xlu0 %1752
        %v1755 = vmul.f32 %v1693, %v1311
        %v1756 = vmul.f32 %v1697, %v1317
        %v1757 = vmul.f32 %v1701, %v1323
        %v1758 = vmul.f32 %v1705, %v1329
        %v1759 = vmul.f32 %v1709, %v1335
        %v1760 = vmul.f32 %v1713, %v1341
        %v1761 = vmul.f32 %v1717, %v1347
        %v1762 = vmul.f32 %v1721, %v1353
        %v1763 = vmul.f32 %v1725, %v1359
        %v1764 = vmul.f32 %v1729, %v1365
        %v1765 = vmul.f32 %v1733, %v1371
        %v1766 = vmul.f32 %v1737, %v1377
        %v1767 = vmul.f32 %v1741, %v1383
        %v1768 = vmul.f32 %v1745, %v1389
        %v1769 = vmul.f32 %v1749, %v1395
        %v1770 = vmul.f32 %v1753, %v1401
        %v1771 = vadd.f32 %v1675, %v1755
        %v1772 = vadd.f32 %v1676, %v1756
        %v1773 = vadd.f32 %v1677, %v1757
        %v1774 = vadd.f32 %v1678, %v1758
        %v1775 = vadd.f32 %v1679, %v1759
        %v1776 = vadd.f32 %v1680, %v1760
        %v1777 = vadd.f32 %v1681, %v1761
        %v1778 = vadd.f32 %v1682, %v1762
        %v1779 = vadd.f32 %v1683, %v1763
        %v1780 = vadd.f32 %v1684, %v1764
        %v1781 = vadd.f32 %v1685, %v1765
        %v1782 = vadd.f32 %v1686, %v1766
        %v1783 = vadd.f32 %v1687, %v1767
        %v1784 = vadd.f32 %v1688, %v1768
        %v1785 = vadd.f32 %v1689, %v1769
        %v1786 = vadd.f32 %v1690, %v1770
        %v1787 = vld [vmem:[%s7] sm:$0xff]
        %v1788 = vld [vmem:[%s7 + $0x8] sm:$0xff]
        %v1789 = vld [vmem:[%s7 + $0x10] sm:$0xff]
        %v1790 = vld [vmem:[%s7 + $0x18] sm:$0xff]
        %v1791 = vld [vmem:[%s7 + $0x20] sm:$0xff]
        %v1792 = vld [vmem:[%s7 + $0x28] sm:$0xff]
        %v1793 = vld [vmem:[%s7 + $0x30] sm:$0xff]
        %v1794 = vld [vmem:[%s7 + $0x38] sm:$0xff]
        %v1795 = vld [vmem:[%s7 + $0x40] sm:$0xff]
        %v1796 = vld [vmem:[%s7 + $0x48] sm:$0xff]
        %v1797 = vld [vmem:[%s7 + $0x50] sm:$0xff]
        %v1798 = vld [vmem:[%s7 + $0x58] sm:$0xff]
        %v1799 = vld [vmem:[%s7 + $0x60] sm:$0xff]
        %v1800 = vld [vmem:[%s7 + $0x68] sm:$0xff]
        %v1801 = vld [vmem:[%s7 + $0x70] sm:$0xff]
        %v1802 = vld [vmem:[%s7 + $0x78] sm:$0xff]
        %v1803 = vld [vmem:[%s8] sm:$0x1]
        %v1805 = vlaneseq
        %v1806 = vshrl.u32 %v1805, 7
        %v1807 = vsub.s32 0, %v1806
        %v1808 = vrot.slane %v1803, %v1807
        %1810 = vmatprep.subr.mxu0 0.0
        %1811 = vmatpush1.msra.mxu0 %v1802
        %1812 = vmatprep.subr.mxu0 0.0
        %1813 = vmatpush1.msra.mxu0 %v1801
        %1814 = vmatprep.subr.mxu0 0.0
        %1815 = vmatpush1.msra.mxu0 %v1800
        %1816 = vmatprep.subr.mxu0 0.0
        %1817 = vmatpush1.msra.mxu0 %v1799
        %1818 = vmatprep.subr.mxu0 0.0
        %1819 = vmatpush1.msra.mxu0 %v1798
        %1820 = vmatprep.subr.mxu0 0.0
        %1821 = vmatpush1.msra.mxu0 %v1797
        %1822 = vmatprep.subr.mxu0 0.0
        %1823 = vmatpush1.msra.mxu0 %v1796
        %1824 = vmatprep.subr.mxu0 0.0
        %1825 = vmatpush1.msra.mxu0 %v1795
        %1826 = vmatprep.subr.mxu0 0.0
        %1827 = vmatpush1.msra.mxu0 %v1794
        %1828 = vmatprep.subr.mxu0 0.0
        %1829 = vmatpush1.msra.mxu0 %v1793
        %1830 = vmatprep.subr.mxu0 0.0
        %1831 = vmatpush1.msra.mxu0 %v1792
        %1832 = vmatprep.subr.mxu0 0.0
        %1833 = vmatpush1.msra.mxu0 %v1791
        %1834 = vmatprep.subr.mxu0 0.0
        %1835 = vmatpush1.msra.mxu0 %v1790
        %1836 = vmatprep.subr.mxu0 0.0
        %1837 = vmatpush1.msra.mxu0 %v1789
        %1838 = vmatprep.subr.mxu0 0.0
        %1839 = vmatpush1.msra.mxu0 %v1788
        %1840 = vmatprep.subr.mxu0 0.0
        %1841 = vmatpush1.msra.mxu0 %v1787
        %1842 = vmatprep.subr.mxu0 0.0
        %1843 = vmatpush2.msra.mxu0 0.0
        %1844 = vmatprep.subr.mxu0 0.0
        %1845 = vmatpush2.msra.mxu0 0.0
        %1846 = vmatprep.subr.mxu0 0.0
        %1847 = vmatpush2.msra.mxu0 0.0
        %1848 = vmatprep.subr.mxu0 0.0
        %1849 = vmatpush2.msra.mxu0 0.0
        %1850 = vmatprep.subr.mxu0 0.0
        %1851 = vmatpush2.msra.mxu0 0.0
        %1852 = vmatprep.subr.mxu0 0.0
        %1853 = vmatpush2.msra.mxu0 0.0
        %1854 = vmatprep.subr.mxu0 0.0
        %1855 = vmatpush2.msra.mxu0 0.0
        %1856 = vmatprep.subr.mxu0 0.0
        %1857 = vmatpush2.msra.mxu0 0.0
        %1858 = vmatprep.subr.mxu0 0.0
        %1859 = vmatpush2.msra.mxu0 0.0
        %1860 = vmatprep.subr.mxu0 0.0
        %1861 = vmatpush2.msra.mxu0 0.0
        %1862 = vmatprep.subr.mxu0 0.0
        %1863 = vmatpush2.msra.mxu0 0.0
        %1864 = vmatprep.subr.mxu0 0.0
        %1865 = vmatpush2.msra.mxu0 0.0
        %1866 = vmatprep.subr.mxu0 0.0
        %1867 = vmatpush2.msra.mxu0 0.0
        %1868 = vmatprep.subr.mxu0 0.0
        %1869 = vmatpush2.msra.mxu0 0.0
        %1870 = vmatprep.subr.mxu0 0.0
        %1871 = vmatpush2.msra.mxu0 0.0
        %1872 = vmatprep.subr.mxu0 0.0
        %1873 = vmatpush2.msra.mxu0 0.0
        %1874 = vmatprep.mubr.f32.mxu0 0.0
        %1875 = vmatmul.mubr.f32.gmra.mxu0 %v1771
        %v1876 = vpop.f32.mrf.mxu0
        %v1877 = vadd.f32 %v1808, %v1876
        %v1878 = vpop.f32.mrf.mxu0
        %1879 = vmatprep.mubr.f32.mxu0 0.0
        %1880 = vmatmul.mubr.f32.gmra.mxu0 %v1772
        %v1881 = vpop.f32.mrf.mxu0
        %v1882 = vadd.f32 %v1808, %v1881
        %v1883 = vpop.f32.mrf.mxu0
        %1884 = vmatprep.mubr.f32.mxu0 0.0
        %1885 = vmatmul.mubr.f32.gmra.mxu0 %v1773
        %v1886 = vpop.f32.mrf.mxu0
        %v1887 = vadd.f32 %v1808, %v1886
        %v1888 = vpop.f32.mrf.mxu0
        %1889 = vmatprep.mubr.f32.mxu0 0.0
        %1890 = vmatmul.mubr.f32.gmra.mxu0 %v1774
        %v1891 = vpop.f32.mrf.mxu0
        %v1892 = vadd.f32 %v1808, %v1891
        %v1893 = vpop.f32.mrf.mxu0
        %1894 = vmatprep.mubr.f32.mxu0 0.0
        %1895 = vmatmul.mubr.f32.gmra.mxu0 %v1775
        %v1896 = vpop.f32.mrf.mxu0
        %v1897 = vadd.f32 %v1808, %v1896
        %v1898 = vpop.f32.mrf.mxu0
        %1899 = vmatprep.mubr.f32.mxu0 0.0
        %1900 = vmatmul.mubr.f32.gmra.mxu0 %v1776
        %v1901 = vpop.f32.mrf.mxu0
        %v1902 = vadd.f32 %v1808, %v1901
        %v1903 = vpop.f32.mrf.mxu0
        %1904 = vmatprep.mubr.f32.mxu0 0.0
        %1905 = vmatmul.mubr.f32.gmra.mxu0 %v1777
        %v1906 = vpop.f32.mrf.mxu0
        %v1907 = vadd.f32 %v1808, %v1906
        %v1908 = vpop.f32.mrf.mxu0
        %1909 = vmatprep.mubr.f32.mxu0 0.0
        %1910 = vmatmul.mubr.f32.gmra.mxu0 %v1778
        %v1911 = vpop.f32.mrf.mxu0
        %v1912 = vadd.f32 %v1808, %v1911
        %v1913 = vpop.f32.mrf.mxu0
        %1914 = vmatprep.mubr.f32.mxu0 0.0
        %1915 = vmatmul.mubr.f32.gmra.mxu0 %v1779
        %v1916 = vpop.f32.mrf.mxu0
        %v1917 = vadd.f32 %v1808, %v1916
        %v1918 = vpop.f32.mrf.mxu0
        %1919 = vmatprep.mubr.f32.mxu0 0.0
        %1920 = vmatmul.mubr.f32.gmra.mxu0 %v1780
        %v1921 = vpop.f32.mrf.mxu0
        %v1922 = vadd.f32 %v1808, %v1921
        %v1923 = vpop.f32.mrf.mxu0
        %1924 = vmatprep.mubr.f32.mxu0 0.0
        %1925 = vmatmul.mubr.f32.gmra.mxu0 %v1781
        %v1926 = vpop.f32.mrf.mxu0
        %v1927 = vadd.f32 %v1808, %v1926
        %v1928 = vpop.f32.mrf.mxu0
        %1929 = vmatprep.mubr.f32.mxu0 0.0
        %1930 = vmatmul.mubr.f32.gmra.mxu0 %v1782
        %v1931 = vpop.f32.mrf.mxu0
        %v1932 = vadd.f32 %v1808, %v1931
        %v1933 = vpop.f32.mrf.mxu0
        %1934 = vmatprep.mubr.f32.mxu0 0.0
        %1935 = vmatmul.mubr.f32.gmra.mxu0 %v1783
        %v1936 = vpop.f32.mrf.mxu0
        %v1937 = vadd.f32 %v1808, %v1936
        %v1938 = vpop.f32.mrf.mxu0
        %1939 = vmatprep.mubr.f32.mxu0 0.0
        %1940 = vmatmul.mubr.f32.gmra.mxu0 %v1784
        %v1941 = vpop.f32.mrf.mxu0
        %v1942 = vadd.f32 %v1808, %v1941
        %v1943 = vpop.f32.mrf.mxu0
        %1944 = vmatprep.mubr.f32.mxu0 0.0
        %1945 = vmatmul.mubr.f32.gmra.mxu0 %v1785
        %v1946 = vpop.f32.mrf.mxu0
        %v1947 = vadd.f32 %v1808, %v1946
        %v1948 = vpop.f32.mrf.mxu0
        %1949 = vmatprep.mubr.f32.mxu0 0.0
        %1950 = vmatmul.mubr.f32.gmra.mxu0 %v1786
        %v1951 = vpop.f32.mrf.mxu0
        %v1952 = vadd.f32 %v1808, %v1951
        %v1953 = vpop.f32.mrf.mxu0
        %1954 = vdwg.mxu0
        %1955 = vst [vmem:[%s420] sm:$0xff] %v1877
        %1956 = vst [vmem:[%s420 + $0x8] sm:$0xff] %v1882
        %1957 = vst [vmem:[%s420 + $0x10] sm:$0xff] %v1887
        %1958 = vst [vmem:[%s420 + $0x18] sm:$0xff] %v1892
        %1959 = vst [vmem:[%s420 + $0x20] sm:$0xff] %v1897
        %1960 = vst [vmem:[%s420 + $0x28] sm:$0xff] %v1902
        %1961 = vst [vmem:[%s420 + $0x30] sm:$0xff] %v1907
        %1962 = vst [vmem:[%s420 + $0x38] sm:$0xff] %v1912
        %1963 = vst [vmem:[%s420 + $0x40] sm:$0xff] %v1917
        %1964 = vst [vmem:[%s420 + $0x48] sm:$0xff] %v1922
        %1965 = vst [vmem:[%s420 + $0x50] sm:$0xff] %v1927
        %1966 = vst [vmem:[%s420 + $0x58] sm:$0xff] %v1932
        %1967 = vst [vmem:[%s420 + $0x60] sm:$0xff] %v1937
        %1968 = vst [vmem:[%s420 + $0x68] sm:$0xff] %v1942
        %1969 = vst [vmem:[%s420 + $0x70] sm:$0xff] %v1947
        %1970 = vst [vmem:[%s420 + $0x78] sm:$0xff] %v1952
        %s1971 = sand.u32 %s237, 1
        %s1972 = scalar_lea.sflag [#allocation4], %s1971
        %s1973 = sand.u32 %s237, 1
        %s1974 = smul.addr %s1973, 128
        %s1975 = scalar_lea.vmem [#allocation10], %s1974
        // Predicated region
        $region73: #{tpu_custom_call.1} parent=55 // pred_check
          %p1976 = pneg %p247
        $region74: #{tpu_custom_call.1} parent=55 // pred_check_branch
          %1978 = sbr.rel (%p1976) target = $region76
        $region75: #{tpu_custom_call.1} parent=55 // pred_region
          %s1979 = smul.u32 16, %s30
          %s1981 = ssub.s32 2048, 2048
          %1982 = vsyncadd %s1972, %s1981
          %s1983 = smul.addr %s1979, 128
          %s1984 = scalar_lea.hbm %s9, %s1983
          %s1985 = sshll.u32 %s1975, 4
          %s1986 = int_to_ptr.vmem [resolvable:$true] %s1985
          %1991 = dma.vmem_to_hbm [thread:$0]  %s1986, 2048, %s1984, %s1972, 128, 128, 8
        $region76: #{tpu_custom_call.1} parent=55 // pred_fallthru
          _
      $region56: #{tpu_custom_call.1} parent=5 // pred_fallthru
        _
      %p1992 = scmp.le.s32.totalorder 2, %s25
      // Predicated region
      $region77: #{tpu_custom_call.1} parent=5 // pred_check
        %p1993 = pneg %p1992
      $region78: #{tpu_custom_call.1} parent=5 // pred_check_branch
        %1995 = sbr.rel (%p1993) target = $region80
      $region79: #{tpu_custom_call.1} parent=5 // pred_region
        %s1996 = ssub.s32 %s25, 2
        // Predicated region
        $region81: #{tpu_custom_call.1} parent=79 // pred_check
          %p1997 = pneg %p253
        $region82: #{tpu_custom_call.1} parent=79 // pred_check_branch
          %1999 = sbr.rel (%p1997) target = $region84
        $region83: #{tpu_custom_call.1} parent=79 // pred_region
          %s2000 = sand.u32 %s238, 1
          %s2001 = scalar_lea.sflag [#allocation4], %s2000
          %s2002 = sand.u32 %s238, 1
          %s2003 = smul.addr %s2002, 128
          %s2004 = scalar_lea.vmem [#allocation10], %s2003
          %2005 = dma.done %s2001, 2048
        $region84: #{tpu_custom_call.1} parent=79 // pred_fallthru
          _
      $region80: #{tpu_custom_call.1} parent=5 // pred_fallthru
        _
    $region6: #{tpu_custom_call.1} parent=1 // loop_footer
      %s29 = sadd.s32 1, %s25
    $region7: #{tpu_custom_call.1} parent=1 // loop_footer_branch
      %24 = sbr.rel target = $region3
    $region8: #{tpu_custom_call.1} parent=1 // loop_exit
      _
    %2006 = vsyncpa [#allocation3], 1
    %s2007 = scalar_lea.sflag [#allocation3], 1
    %2008 = vsyncpa %s2007, 1
    %2009 = vsyncpa [#allocation6], 1
    %s2010 = scalar_lea.sflag [#allocation6], 1
    %2011 = vsyncpa %s2010, 1
    %2012 = vsyncpa [#allocation9], 1
    %2013 = vsyncpa [#allocation4], 1
    %s2014 = scalar_lea.sflag [#allocation4], 1
    %2015 = vsyncpa %s2014, 1

</llo_original>
